<compile_context>
chip_gen: v6e
topology: v6e:2x2x1
jax: 0.10.0
libtpu: 0.0.40
codegen_flags: <defaults>
</compile_context>

<pallas_src>
import functools
import math

import jax
import jax.numpy as jnp
from jax.experimental import pallas as pl
from jax.experimental.pallas import tpu as pltpu

N_GATES = 4


# --------------------------------------------------------------------------- #
# Kernel: chunked recurrence with VMEM-resident weights, cell state and DND.    #
# --------------------------------------------------------------------------- #
def dnd_lstm_seq_kernel(ptr0_ref, valid0_ref, ttot_ref,              # SMEM scalars
                        xs_ref, b_ref,                               # streamed / resident blocks
                        wi_hbm, wh_hbm, h0_hbm, c0_hbm,              # ANY (HBM) residents
                        keys_hbm, vals_hbm, mask_hbm, invk_hbm,      # ANY (HBM) DND state
                        hs_ref, c_out_ref,                           # blocked outputs
                        keys_out_hbm, vals_out_hbm, mask_out_hbm,    # ANY outputs (aliased)
                        wi_s, wh_s, keys_s, vals_s, mask_s, invk_s,  # VMEM scratch
                        h_s, c_s, prei_s,
                        ptr_s, sems):                                # SMEM scratch + DMA sems
    chunk = pl.program_id(0)
    n_chunks = pl.num_programs(0)

    TCB, IN = xs_ref.shape
    B, HP = h_s.shape
    Tc = TCB // B
    D = mask_s.shape[1]

    # ---- chunk 0: DMA all carried state into VMEM scratch, once ----
    @pl.when(chunk == 0)
    def _init():
        cps = [pltpu.make_async_copy(wi_hbm, wi_s, sems.at[0]),
               pltpu.make_async_copy(wh_hbm, wh_s, sems.at[1]),
               pltpu.make_async_copy(h0_hbm, h_s, sems.at[2]),
               pltpu.make_async_copy(c0_hbm, c_s, sems.at[3]),
               pltpu.make_async_copy(keys_hbm, keys_s, sems.at[4]),
               pltpu.make_async_copy(vals_hbm, vals_s, sems.at[5]),
               pltpu.make_async_copy(mask_hbm, mask_s, sems.at[6]),
               pltpu.make_async_copy(invk_hbm, invk_s, sems.at[7])]
        for cp in cps:
            cp.start()
        for cp in cps:
            cp.wait()
        ptr_s[0] = ptr0_ref[0]

    # ---- whole-chunk i2h: one (Tc*B, IN) x (IN, 5*HP) MXU matmul ----
    xs_chunk = xs_ref[...].astype(jnp.float32)
    prei_s[...] = (jnp.dot(xs_chunk, wi_s[...], preferred_element_type=jnp.float32)
                   + b_ref[...])

    wh = wh_s[...]
    t_total = ttot_ref[0]
    valid0 = valid0_ref[0]

    def step(lt, carry):
        h, c, ptr = carry
        tg = chunk * Tc + lt
        valid = tg < t_total                 # guards padded tail steps of last chunk

        row0 = lt * B
        x = xs_ref[pl.ds(row0, B), :].astype(jnp.float32)                 # (B, IN)
        preact = (prei_s[pl.ds(row0, B), :]
                  + jnp.dot(h, wh, preferred_element_type=jnp.float32))   # (B, 5*HP)

        # NOTE: sigmoid/tanh also touch padded lanes when hidden_dim < 128.
        gates = jax.nn.sigmoid(preact[:, :N_GATES * HP])
        f_t = gates[:, 0 * HP:1 * HP]
        i_t = gates[:, 1 * HP:2 * HP]
        o_t = gates[:, 2 * HP:3 * HP]
        r_t = gates[:, 3 * HP:4 * HP]
        c_new = jnp.tanh(preact[:, N_GATES * HP:])
        c_t = f_t * c + i_t * c_new

        # ---- DND retrieval: 1-NN under cosine similarity (cached 1/||k||) ----
        keys = keys_s[...]                                                # (D, IN)
        dots = jax.lax.dot_general(x, keys, (((1,), (1,)), ((), ())),
                                   preferred_element_type=jnp.float32)   # (B, D)
        scores = dots * invk_s[...]
        scores = jnp.where(mask_s[...] > 0.5, scores, -1e30)
        lane = jax.lax.broadcasted_iota(jnp.int32, (B, D), 1)
        best = jnp.min(jnp.where(scores >= jnp.max(scores, axis=1, keepdims=True),
                                 lane, D), axis=1, keepdims=True)         # first-max
        onehot = (lane == best).astype(jnp.float32)
        m = jnp.dot(onehot, vals_s[...], preferred_element_type=jnp.float32)  # (B, HP)
        has_mem = jnp.where(jnp.logical_or(valid0 > 0, tg > 0),
                            jnp.float32(1.0), jnp.float32(0.0))
        m_t = jnp.tanh(m) * has_mem

        c_t = c_t + r_t * m_t
        h_t = o_t * jnp.tanh(c_t)

        hs_ref[pl.ds(row0, B), :] = h_t.astype(hs_ref.dtype)

        # ---- DND save: O(B)-row ring append of (x_t, c_t) at slots [ptr, ptr+B) ----
        @pl.when(valid)
        def _save():
            for bb in range(B):                       # B static: unrolled row writes
                row = ptr + bb
                row = jnp.where(row >= D, row - D, row)
                keys_s[pl.ds(row, 1), :] = x[bb:bb + 1, :]
                vals_s[pl.ds(row, 1), :] = c_t[bb:bb + 1, :]
            d_lane = jax.lax.broadcasted_iota(jnp.int32, (1, D), 1)
            rel = d_lane - ptr
            rel = jnp.where(rel < 0, rel + D, rel)    # (slot - ptr) mod D
            hit = rel < B
            xn = jax.lax.rsqrt(jnp.maximum(jnp.sum(x * x, axis=1, keepdims=True),
                                           1e-12))     # (B, 1) new inverse key norms
            newinv = jnp.zeros((1, D), jnp.float32)
            for bb in range(B):
                newinv = newinv + jnp.where(rel == bb, xn[bb:bb + 1, 0:1],
                                            jnp.float32(0.0))
            invk_s[...] = jnp.where(hit, newinv, invk_s[...])
            mask_s[...] = jnp.where(hit, jnp.float32(1.0), mask_s[...])

        nxt = ptr + B
        nxt = jnp.where(nxt >= D, nxt - D, nxt)
        h = jnp.where(valid, h_t, h)
        c = jnp.where(valid, c_t, c)
        ptr = jnp.where(valid, nxt, ptr)
        return h, c, ptr

    h, c, ptr = jax.lax.fori_loop(0, Tc, step, (h_s[...], c_s[...], ptr_s[0]))

    h_s[...] = h
    c_s[...] = c
    ptr_s[0] = ptr
    c_out_ref[...] = c.astype(c_out_ref.dtype)

    # ---- last chunk: write the carried DND state back to HBM (aliased inputs) ----
    @pl.when(chunk == n_chunks - 1)
    def _finalize():
        cps = [pltpu.make_async_copy(keys_s, keys_out_hbm, sems.at[0]),
               pltpu.make_async_copy(vals_s, vals_out_hbm, sems.at[1]),
               pltpu.make_async_copy(mask_s, mask_out_hbm, sems.at[2])]
        for cp in cps:
            cp.start()
        for cp in cps:
            cp.wait()


# --------------------------------------------------------------------------- #
# Wrappers                                                                     #
# --------------------------------------------------------------------------- #
def _round_up(x, m):
    return ((x + m - 1) // m) * m


def _pad_gate_cols(w, hidden_dim, hp):
    """(rows, 5*H) -> (rows, 5*HP): gate g lands at columns [g*HP, g*HP + H)."""
    rows = w.shape[0]
    out = jnp.zeros((rows, (N_GATES + 1) * hp), jnp.float32)
    for g in range(N_GATES + 1):
        out = out.at[:, g * hp:g * hp + hidden_dim].set(
            w[:, g * hidden_dim:(g + 1) * hidden_dim])
    return out


def prepare_params(w_i2h, b_i2h, w_h2h, b_h2h, hidden_dim):
    """Pre-transpose / pad the Linear params into the lane-aligned fused layout."""
    hp = _round_up(hidden_dim, 128)
    wi_pad = _pad_gate_cols(w_i2h.T.astype(jnp.float32), hidden_dim, hp)     # (In, 5*HP)
    wh_pad = jnp.zeros((hp, (N_GATES + 1) * hp), jnp.float32).at[:hidden_dim].set(
        _pad_gate_cols(w_h2h.T.astype(jnp.float32), hidden_dim, hp))         # (HP, 5*HP)
    b_pad = _pad_gate_cols((b_i2h + b_h2h).reshape(1, -1).astype(jnp.float32),
                           hidden_dim, hp)                                   # (1, 5*HP)
    return wi_pad, wh_pad, b_pad


@functools.partial(jax.jit, static_argnames=("t_chunk",))
def dnd_lstm_sequence(xs, h0_pad, c0_pad, wi_pad, wh_pad, b_pad,
                      keys, vals_pad, mask, ptr, *, t_chunk=8):
    """Run T fused DNDLSTMCell steps; DND / cell state is threaded functionally."""
    T, B, IN = xs.shape
    HP = wh_pad.shape[0]
    G5 = wh_pad.shape[1]
    D = keys.shape[0]
    if B > D:
        raise ValueError("batch size must be <= dict_len (sequential ring append)")

    # Chunked time grid: Tc steps per grid invocation; Tc*B kept a multiple of 8
    # so the flattened (Tc*B, .) xs / hs blocks stay sublane-aligned.
    req = 8 // math.gcd(B, 8)
    Tc = max(req, (t_chunk // req) * req)
    if Tc >= T:
        Tc = T
    n_chunks = -(-T // Tc)
    T_pad = n_chunks * Tc

    xs_f = xs.astype(jnp.float32)
    if T_pad != T:
        xs_f = jnp.concatenate(
            [xs_f, jnp.zeros((T_pad - T, B, IN), jnp.float32)], axis=0)
    xs_flat = xs_f.reshape(T_pad * B, IN)

    ptr0 = (jnp.asarray(ptr, jnp.int32) % D).reshape(1)
    valid0 = (jnp.max(mask) > 0.5).astype(jnp.int32).reshape(1)
    ttot = jnp.full((1,), T, jnp.int32)
    invk0 = jax.lax.rsqrt(
        jnp.maximum(jnp.sum(keys.astype(jnp.float32) ** 2, axis=1), 1e-12)).reshape(1, D)

    # VMEM budget: single-copy residents + chunk stream buffers (+50% headroom).
    fb = 4
    scratch_b = (IN * G5 + HP * G5 + D * IN + D * HP + 2 * D
                 + 2 * B * HP + Tc * B * G5) * fb
    stream_b = 2 * (Tc * B * IN + Tc * B * HP) * fb + 2 * (G5 + B * HP) * fb
    vmem_limit = min(max(int((scratch_b + stream_b) * 3 // 2), 32 * 1024 * 1024),
                     96 * 1024 * 1024)

    cost = pl.CostEstimate(
        flops=int(T * (2 * B * HP * G5 + 2 * B * IN * G5 + 2 * B * IN * D
                       + 2 * B * D * HP)),
        transcendentals=int(T * B * 7 * HP),
        bytes_accessed=int(fb * (xs_flat.size + T_pad * B * HP + HP * G5 + IN * G5
                                 + 2 * (D * IN + D * HP + 2 * D) + 4 * B * HP)))

    hs_flat, c_fin, keys_o, vals_o, mask_o = pl.pallas_call(
        dnd_lstm_seq_kernel,
        grid=(n_chunks,),
        in_specs=[
            pl.BlockSpec(memory_space=pltpu.MemorySpace.SMEM),      # ptr0
            pl.BlockSpec(memory_space=pltpu.MemorySpace.SMEM),      # valid0
            pl.BlockSpec(memory_space=pltpu.MemorySpace.SMEM),      # t_total
            pl.BlockSpec((Tc * B, IN), lambda i: (i, 0)),           # xs chunk (streamed)
            pl.BlockSpec((1, G5), lambda i: (0, 0)),                # fused bias (resident)
            pl.BlockSpec(memory_space=pl.ANY),                      # W_i2h
            pl.BlockSpec(memory_space=pl.ANY),                      # W_h2h
            pl.BlockSpec(memory_space=pl.ANY),                      # h0
            pl.BlockSpec(memory_space=pl.ANY),                      # c0
            pl.BlockSpec(memory_space=pl.ANY),                      # keys
            pl.BlockSpec(memory_space=pl.ANY),                      # vals
            pl.BlockSpec(memory_space=pl.ANY),                      # mask
            pl.BlockSpec(memory_space=pl.ANY),                      # 1/||key||
        ],
        out_specs=[
            pl.BlockSpec((Tc * B, HP), lambda i: (i, 0)),           # hs chunk
            pl.BlockSpec((B, HP), lambda i: (0, 0)),                # c final
            pl.BlockSpec(memory_space=pl.ANY),                      # keys out
            pl.BlockSpec(memory_space=pl.ANY),                      # vals out
            pl.BlockSpec(memory_space=pl.ANY),                      # mask out
        ],
        out_shape=(
            jax.ShapeDtypeStruct((T_pad * B, HP), jnp.float32),
            jax.ShapeDtypeStruct((B, HP), jnp.float32),
            jax.ShapeDtypeStruct((D, IN), jnp.float32),
            jax.ShapeDtypeStruct((D, HP), jnp.float32),
            jax.ShapeDtypeStruct((1, D), jnp.float32),
        ),
        scratch_shapes=[
            pltpu.VMEM((IN, G5), jnp.float32),        # W_i2h resident
            pltpu.VMEM((HP, G5), jnp.float32),        # W_h2h resident
            pltpu.VMEM((D, IN), jnp.float32),         # keys
            pltpu.VMEM((D, HP), jnp.float32),         # vals
            pltpu.VMEM((1, D), jnp.float32),          # mask
            pltpu.VMEM((1, D), jnp.float32),          # cached 1/||key||
            pltpu.VMEM((B, HP), jnp.float32),         # h
            pltpu.VMEM((B, HP), jnp.float32),         # c
            pltpu.VMEM((Tc * B, G5), jnp.float32),    # per-chunk i2h preactivations
            pltpu.SMEM((1,), jnp.int32),              # ring pointer
            pltpu.SemaphoreType.DMA((8,)),            # init / finalize DMA sems
        ],
        input_output_aliases={9: 2, 10: 3, 11: 4},    # keys/vals/mask updated in place
        compiler_params=pltpu.CompilerParams(
            dimension_semantics=("arbitrary",),
            vmem_limit_bytes=vmem_limit),
        cost_estimate=cost,
    )(ptr0, valid0, ttot, xs_flat, b_pad, wi_pad, wh_pad, h0_pad, c0_pad,
      keys, vals_pad, mask, invk0)

    hs = hs_flat.reshape(T_pad, B, HP)[:T]
    new_ptr = (jnp.asarray(ptr, jnp.int32) + T * B) % D
    return hs, c_fin, keys_o, vals_o, mask_o, new_ptr


def dnd_lstm_cell(x_t, h_pad, c_pad, wi_pad, wh_pad, b_pad, keys, vals_pad, mask, ptr):
    """Single-step forward == DNDLSTMCell.forward (padded h/c state, HP columns)."""
    hs, c_t, keys_o, vals_o, mask_o, new_ptr = dnd_lstm_sequence(
        x_t[None], h_pad, c_pad, wi_pad, wh_pad, b_pad, keys, vals_pad, mask, ptr,
        t_chunk=8)
    return (hs[0], c_t), (keys_o, vals_o, mask_o, new_ptr)


# --------------------------------------------------------------------------- #
# Pure-JAX reference of the PyTorch module semantics (for sanity checks).      #
# --------------------------------------------------------------------------- #
def _reference_step(x_t, h, c, wi_t, bi, wh_t, bh, keys, vals, mask):
    H = h.shape[1]
    preact = x_t @ wi_t + bi + h @ wh_t + bh
    gates = jax.nn.sigmoid(preact[:, :N_GATES * H])
    f_t, i_t, o_t, r_t = (gates[:, :H], gates[:, H:2 * H],
                          gates[:, 2 * H:3 * H], gates[:, 3 * H:4 * H])
    c_new = jnp.tanh(preact[:, N_GATES * H:])
    c_t = f_t * c + i_t * c_new
    dots = x_t @ keys.T
    denom = jnp.maximum(jnp.linalg.norm(x_t, axis=1, keepdims=True)
                        * jnp.linalg.norm(keys, axis=1, keepdims=True).T, 1e-8)
    sim = jnp.where(mask > 0.5, dots / denom, -1e30)
    best = jnp.argmax(sim, axis=1)
    m_t = jnp.tanh(vals[best]) * jnp.any(mask > 0.5).astype(jnp.float32)
    c_t = c_t + r_t * m_t
    h_t = o_t * jnp.tanh(c_t)
    return h_t, c_t


def _reference_save(keys, vals, mask, ptr, x_t, c_t):
    D = keys.shape[0]
    B = x_t.shape[0]
    slots = (ptr + jnp.arange(B)) % D
    return (keys.at[slots].set(x_t), vals.at[slots].set(c_t),
            mask.at[0, slots].set(1.0), (ptr + B) % D)


# --------------------------------------------------------------------------- #
if __name__ == "__main__":
    B, INPUT_DIM, HIDDEN_DIM, DICT_LEN, T = 4, 16, 32, 8, 10
    HP = _round_up(HIDDEN_DIM, 128)

    key = jax.random.PRNGKey(0)
    k_x, k_h, k_c, k_wi, k_wh, k_keys, k_vals = jax.random.split(key, 7)

    xs = jax.random.normal(k_x, (T, B, INPUT_DIM), jnp.float32)
    h0 = jax.random.normal(k_h, (B, HIDDEN_DIM), jnp.float32)
    c0 = jax.random.normal(k_c, (B, HIDDEN_DIM), jnp.float32)

    # Parameters: orthogonal weights, zero biases (matches reset_parameter()).
    ortho = jax.nn.initializers.orthogonal()
    w_i2h = ortho(k_wi, ((N_GATES + 1) * HIDDEN_DIM, INPUT_DIM), jnp.float32)
    w_h2h = ortho(k_wh, ((N_GATES + 1) * HIDDEN_DIM, HIDDEN_DIM), jnp.float32)
    b_i2h = jnp.zeros(((N_GATES + 1) * HIDDEN_DIM,), jnp.float32)
    b_h2h = jnp.zeros(((N_GATES + 1) * HIDDEN_DIM,), jnp.float32)
    wi_pad, wh_pad, b_pad = prepare_params(w_i2h, b_i2h, w_h2h, b_h2h, HIDDEN_DIM)

    # DND state: pre-populate half of the dictionary slots.
    keys_mem = jax.random.normal(k_keys, (DICT_LEN, INPUT_DIM), jnp.float32)
    vals_mem = jax.random.normal(k_vals, (DICT_LEN, HIDDEN_DIM), jnp.float32)
    mask_mem = jnp.concatenate([jnp.ones((1, DICT_LEN // 2), jnp.float32),
                                jnp.zeros((1, DICT_LEN - DICT_LEN // 2), jnp.float32)],
                               axis=1)
    ptr0 = jnp.int32(DICT_LEN // 2)

    # Padded (lane-aligned) state for the kernel.
    h0_p = jnp.pad(h0, ((0, 0), (0, HP - HIDDEN_DIM)))
    c0_p = jnp.pad(c0, ((0, 0), (0, HP - HIDDEN_DIM)))
    vals_p = jnp.pad(vals_mem, ((0, 0), (0, HP - HIDDEN_DIM)))

    # -------- pure-JAX reference, step by step (module semantics) --------
    wi_t, wh_t = w_i2h.T, w_h2h.T
    bi, bh = b_i2h.reshape(1, -1), b_h2h.reshape(1, -1)
    h_r, c_r = h0, c0
    keys_r, vals_r, mask_r, ptr_r = keys_mem, vals_mem, mask_mem, ptr0
    hs_ref_steps = []
    for t in range(T):
        h_r, c_r = _reference_step(xs[t], h_r, c_r, wi_t, bi, wh_t, bh,
                                   keys_r, vals_r, mask_r)
        keys_r, vals_r, mask_r, ptr_r = _reference_save(keys_r, vals_r, mask_r,
                                                        ptr_r, xs[t], c_r)
        hs_ref_steps.append(h_r)
    hs_ref = jnp.stack(hs_ref_steps)

    # -------- single-step "cell" call (matches DNDLSTMCell.forward) --------
    (h1_p, c1_p), (k1, v1, m1, p1) = dnd_lstm_cell(
        xs[0], h0_p, c0_p, wi_pad, wh_pad, b_pad, keys_mem, vals_p, mask_mem, ptr0)
    jax.block_until_ready((h1_p, c1_p, k1, v1, m1, p1))

    h1_ref, c1_ref = _reference_step(xs[0], h0, c0, wi_t, bi, wh_t, bh,
                                     keys_mem, vals_mem, mask_mem)
    k1_ref, v1_ref, m1_ref, p1_ref = _reference_save(keys_mem, vals_mem, mask_mem,
                                                     ptr0, xs[0], c1_ref)
    assert jnp.allclose(h1_p[:, :HIDDEN_DIM], h1_ref, atol=2e-5, rtol=2e-5)
    assert jnp.allclose(c1_p[:, :HIDDEN_DIM], c1_ref, atol=2e-5, rtol=2e-5)
    assert jnp.allclose(k1, k1_ref, atol=2e-5, rtol=2e-5)
    assert jnp.allclose(v1[:, :HIDDEN_DIM], v1_ref, atol=2e-5, rtol=2e-5)
    assert jnp.allclose(m1, m1_ref)
    assert int(p1) == int(p1_ref)

    # -------- fused multi-chunk sequence call (Tc=4 -> 3 chunks, padded tail) ----
    hs, c_fin, keys_o, vals_o, mask_o, ptr_o = dnd_lstm_sequence(
        xs, h0_p, c0_p, wi_pad, wh_pad, b_pad, keys_mem, vals_p, mask_mem, ptr0,
        t_chunk=4)
    jax.block_until_ready((hs, c_fin, keys_o, vals_o, mask_o, ptr_o))

    assert jnp.allclose(hs[:, :, :HIDDEN_DIM], hs_ref, atol=5e-5, rtol=5e-5)
    assert jnp.allclose(c_fin[:, :HIDDEN_DIM], c_r, atol=5e-5, rtol=5e-5)
    assert jnp.allclose(keys_o, keys_r, atol=2e-5, rtol=2e-5)
    assert jnp.allclose(vals_o[:, :HIDDEN_DIM], vals_r, atol=5e-5, rtol=5e-5)
    assert jnp.allclose(mask_o, mask_r)
    assert int(ptr_o) == int(ptr_r)

    print("KERNEL_OK")
</pallas_src>

<mosaic_0001>
module attributes {stable_mosaic.version = 11 : i64} {
  func.func @dnd_lstm_seq_kernel(%arg0: i32, %arg1: memref<1xi32, #tpu.memory_space<smem>>, %arg2: memref<1xi32, #tpu.memory_space<smem>>, %arg3: memref<1xi32, #tpu.memory_space<smem>>, %arg4: memref<4x16xf32, #tpu.memory_space<vmem>>, %arg5: memref<1x640xf32, #tpu.memory_space<vmem>>, %arg6: memref<16x640xf32, #tpu.memory_space<any>>, %arg7: memref<128x640xf32, #tpu.memory_space<any>>, %arg8: memref<4x128xf32, #tpu.memory_space<any>>, %arg9: memref<4x128xf32, #tpu.memory_space<any>>, %arg10: memref<8x16xf32, #tpu.memory_space<any>>, %arg11: memref<8x128xf32, #tpu.memory_space<any>>, %arg12: memref<1x8xf32, #tpu.memory_space<any>>, %arg13: memref<1x8xf32, #tpu.memory_space<any>>, %arg14: memref<4x128xf32, #tpu.memory_space<vmem>>, %arg15: memref<4x128xf32, #tpu.memory_space<vmem>>, %arg16: memref<8x16xf32, #tpu.memory_space<any>>, %arg17: memref<8x128xf32, #tpu.memory_space<any>>, %arg18: memref<1x8xf32, #tpu.memory_space<any>>, %arg19: memref<16x640xf32, #tpu.memory_space<vmem>>, %arg20: memref<128x640xf32, #tpu.memory_space<vmem>>, %arg21: memref<8x16xf32, #tpu.memory_space<vmem>>, %arg22: memref<8x128xf32, #tpu.memory_space<vmem>>, %arg23: memref<1x8xf32, #tpu.memory_space<vmem>>, %arg24: memref<1x8xf32, #tpu.memory_space<vmem>>, %arg25: memref<4x128xf32, #tpu.memory_space<vmem>>, %arg26: memref<4x128xf32, #tpu.memory_space<vmem>>, %arg27: memref<4x640xf32, #tpu.memory_space<vmem>>, %arg28: memref<1xi32, #tpu.memory_space<smem>>, %arg29: memref<8x!tpu.dma_semaphore, #tpu.memory_space<semaphore_mem>>) attributes {dimension_semantics = [#tpu.dimension_semantics<arbitrary>], iteration_bounds = array<i64: 1>, scalar_prefetch = 0 : i64, scratch_operands = 11 : i64, tpu.core_type = #tpu.core_type<tc>, window_params = [{transform_indices = @transform_0, window_bounds = array<i64: 1>}, {transform_indices = @transform_1, window_bounds = array<i64: 1>}, {transform_indices = @transform_2, window_bounds = array<i64: 1>}, {transform_indices = @transform_3, window_bounds = array<i64: 4, 16>}, {pipeline_mode = #tpu.pipeline_mode<synchronous>, transform_indices = @transform_4, window_bounds = array<i64: 1, 640>}, {}, {}, {}, {}, {}, {}, {}, {}, {transform_indices = @transform_13, window_bounds = array<i64: 4, 128>}, {pipeline_mode = #tpu.pipeline_mode<synchronous>, transform_indices = @transform_14, window_bounds = array<i64: 4, 128>}, {}, {}, {}]} {
    %c0_i32 = arith.constant 0 : i32
    %0 = arith.cmpi eq, %arg0, %c0_i32 : i32
    %1 = arith.extui %0 : i1 to i32
    %c0_i32_0 = arith.constant 0 : i32
    %2 = arith.cmpi ne, %1, %c0_i32_0 : i32
    scf.if %2 {
      %c0_i32_55 = arith.constant 0 : i32
      %97 = tpu.memref_slice %arg29[%c0_i32_55] : memref<8x!tpu.dma_semaphore, #tpu.memory_space<semaphore_mem>> -> memref<1x!tpu.dma_semaphore, #tpu.memory_space<semaphore_mem>>
      %98 = tpu.memref_squeeze %97 : memref<1x!tpu.dma_semaphore, #tpu.memory_space<semaphore_mem>> -> memref<!tpu.dma_semaphore, #tpu.memory_space<semaphore_mem>>
      tpu.enqueue_dma source(%arg6 : memref<16x640xf32, #tpu.memory_space<any>>) target(%arg19 : memref<16x640xf32, #tpu.memory_space<vmem>>) target_semaphore(%98 : memref<!tpu.dma_semaphore, #tpu.memory_space<semaphore_mem>>)
      %c1_i32_56 = arith.constant 1 : i32
      %99 = tpu.memref_slice %arg29[%c1_i32_56] : memref<8x!tpu.dma_semaphore, #tpu.memory_space<semaphore_mem>> -> memref<1x!tpu.dma_semaphore, #tpu.memory_space<semaphore_mem>>
      %100 = tpu.memref_squeeze %99 : memref<1x!tpu.dma_semaphore, #tpu.memory_space<semaphore_mem>> -> memref<!tpu.dma_semaphore, #tpu.memory_space<semaphore_mem>>
      tpu.enqueue_dma source(%arg7 : memref<128x640xf32, #tpu.memory_space<any>>) target(%arg20 : memref<128x640xf32, #tpu.memory_space<vmem>>) target_semaphore(%100 : memref<!tpu.dma_semaphore, #tpu.memory_space<semaphore_mem>>)
      %c2_i32 = arith.constant 2 : i32
      %101 = tpu.memref_slice %arg29[%c2_i32] : memref<8x!tpu.dma_semaphore, #tpu.memory_space<semaphore_mem>> -> memref<1x!tpu.dma_semaphore, #tpu.memory_space<semaphore_mem>>
      %102 = tpu.memref_squeeze %101 : memref<1x!tpu.dma_semaphore, #tpu.memory_space<semaphore_mem>> -> memref<!tpu.dma_semaphore, #tpu.memory_space<semaphore_mem>>
      tpu.enqueue_dma source(%arg8 : memref<4x128xf32, #tpu.memory_space<any>>) target(%arg25 : memref<4x128xf32, #tpu.memory_space<vmem>>) target_semaphore(%102 : memref<!tpu.dma_semaphore, #tpu.memory_space<semaphore_mem>>)
      %c3_i32 = arith.constant 3 : i32
      %103 = tpu.memref_slice %arg29[%c3_i32] : memref<8x!tpu.dma_semaphore, #tpu.memory_space<semaphore_mem>> -> memref<1x!tpu.dma_semaphore, #tpu.memory_space<semaphore_mem>>
      %104 = tpu.memref_squeeze %103 : memref<1x!tpu.dma_semaphore, #tpu.memory_space<semaphore_mem>> -> memref<!tpu.dma_semaphore, #tpu.memory_space<semaphore_mem>>
      tpu.enqueue_dma source(%arg9 : memref<4x128xf32, #tpu.memory_space<any>>) target(%arg26 : memref<4x128xf32, #tpu.memory_space<vmem>>) target_semaphore(%104 : memref<!tpu.dma_semaphore, #tpu.memory_space<semaphore_mem>>)
      %c4_i32_57 = arith.constant 4 : i32
      %105 = tpu.memref_slice %arg29[%c4_i32_57] : memref<8x!tpu.dma_semaphore, #tpu.memory_space<semaphore_mem>> -> memref<1x!tpu.dma_semaphore, #tpu.memory_space<semaphore_mem>>
      %106 = tpu.memref_squeeze %105 : memref<1x!tpu.dma_semaphore, #tpu.memory_space<semaphore_mem>> -> memref<!tpu.dma_semaphore, #tpu.memory_space<semaphore_mem>>
      tpu.enqueue_dma source(%arg10 : memref<8x16xf32, #tpu.memory_space<any>>) target(%arg21 : memref<8x16xf32, #tpu.memory_space<vmem>>) target_semaphore(%106 : memref<!tpu.dma_semaphore, #tpu.memory_space<semaphore_mem>>)
      %c5_i32 = arith.constant 5 : i32
      %107 = tpu.memref_slice %arg29[%c5_i32] : memref<8x!tpu.dma_semaphore, #tpu.memory_space<semaphore_mem>> -> memref<1x!tpu.dma_semaphore, #tpu.memory_space<semaphore_mem>>
      %108 = tpu.memref_squeeze %107 : memref<1x!tpu.dma_semaphore, #tpu.memory_space<semaphore_mem>> -> memref<!tpu.dma_semaphore, #tpu.memory_space<semaphore_mem>>
      tpu.enqueue_dma source(%arg11 : memref<8x128xf32, #tpu.memory_space<any>>) target(%arg22 : memref<8x128xf32, #tpu.memory_space<vmem>>) target_semaphore(%108 : memref<!tpu.dma_semaphore, #tpu.memory_space<semaphore_mem>>)
      %c6_i32 = arith.constant 6 : i32
      %109 = tpu.memref_slice %arg29[%c6_i32] : memref<8x!tpu.dma_semaphore, #tpu.memory_space<semaphore_mem>> -> memref<1x!tpu.dma_semaphore, #tpu.memory_space<semaphore_mem>>
      %110 = tpu.memref_squeeze %109 : memref<1x!tpu.dma_semaphore, #tpu.memory_space<semaphore_mem>> -> memref<!tpu.dma_semaphore, #tpu.memory_space<semaphore_mem>>
      tpu.enqueue_dma source(%arg12 : memref<1x8xf32, #tpu.memory_space<any>>) target(%arg23 : memref<1x8xf32, #tpu.memory_space<vmem>>) target_semaphore(%110 : memref<!tpu.dma_semaphore, #tpu.memory_space<semaphore_mem>>)
      %c7_i32 = arith.constant 7 : i32
      %111 = tpu.memref_slice %arg29[%c7_i32] : memref<8x!tpu.dma_semaphore, #tpu.memory_space<semaphore_mem>> -> memref<1x!tpu.dma_semaphore, #tpu.memory_space<semaphore_mem>>
      %112 = tpu.memref_squeeze %111 : memref<1x!tpu.dma_semaphore, #tpu.memory_space<semaphore_mem>> -> memref<!tpu.dma_semaphore, #tpu.memory_space<semaphore_mem>>
      tpu.enqueue_dma source(%arg13 : memref<1x8xf32, #tpu.memory_space<any>>) target(%arg24 : memref<1x8xf32, #tpu.memory_space<vmem>>) target_semaphore(%112 : memref<!tpu.dma_semaphore, #tpu.memory_space<semaphore_mem>>)
      %c0_i32_58 = arith.constant 0 : i32
      %113 = tpu.memref_slice %arg29[%c0_i32_58] : memref<8x!tpu.dma_semaphore, #tpu.memory_space<semaphore_mem>> -> memref<1x!tpu.dma_semaphore, #tpu.memory_space<semaphore_mem>>
      %114 = tpu.memref_squeeze %113 : memref<1x!tpu.dma_semaphore, #tpu.memory_space<semaphore_mem>> -> memref<!tpu.dma_semaphore, #tpu.memory_space<semaphore_mem>>
      tpu.wait_dma2 semaphore(%114 : memref<!tpu.dma_semaphore, #tpu.memory_space<semaphore_mem>>) src(%arg6 : memref<16x640xf32, #tpu.memory_space<any>>) dst(%arg19 : memref<16x640xf32, #tpu.memory_space<vmem>>)
      %c1_i32_59 = arith.constant 1 : i32
      %115 = tpu.memref_slice %arg29[%c1_i32_59] : memref<8x!tpu.dma_semaphore, #tpu.memory_space<semaphore_mem>> -> memref<1x!tpu.dma_semaphore, #tpu.memory_space<semaphore_mem>>
      %116 = tpu.memref_squeeze %115 : memref<1x!tpu.dma_semaphore, #tpu.memory_space<semaphore_mem>> -> memref<!tpu.dma_semaphore, #tpu.memory_space<semaphore_mem>>
      tpu.wait_dma2 semaphore(%116 : memref<!tpu.dma_semaphore, #tpu.memory_space<semaphore_mem>>) src(%arg7 : memref<128x640xf32, #tpu.memory_space<any>>) dst(%arg20 : memref<128x640xf32, #tpu.memory_space<vmem>>)
      %c2_i32_60 = arith.constant 2 : i32
      %117 = tpu.memref_slice %arg29[%c2_i32_60] : memref<8x!tpu.dma_semaphore, #tpu.memory_space<semaphore_mem>> -> memref<1x!tpu.dma_semaphore, #tpu.memory_space<semaphore_mem>>
      %118 = tpu.memref_squeeze %117 : memref<1x!tpu.dma_semaphore, #tpu.memory_space<semaphore_mem>> -> memref<!tpu.dma_semaphore, #tpu.memory_space<semaphore_mem>>
      tpu.wait_dma2 semaphore(%118 : memref<!tpu.dma_semaphore, #tpu.memory_space<semaphore_mem>>) src(%arg8 : memref<4x128xf32, #tpu.memory_space<any>>) dst(%arg25 : memref<4x128xf32, #tpu.memory_space<vmem>>)
      %c3_i32_61 = arith.constant 3 : i32
      %119 = tpu.memref_slice %arg29[%c3_i32_61] : memref<8x!tpu.dma_semaphore, #tpu.memory_space<semaphore_mem>> -> memref<1x!tpu.dma_semaphore, #tpu.memory_space<semaphore_mem>>
      %120 = tpu.memref_squeeze %119 : memref<1x!tpu.dma_semaphore, #tpu.memory_space<semaphore_mem>> -> memref<!tpu.dma_semaphore, #tpu.memory_space<semaphore_mem>>
      tpu.wait_dma2 semaphore(%120 : memref<!tpu.dma_semaphore, #tpu.memory_space<semaphore_mem>>) src(%arg9 : memref<4x128xf32, #tpu.memory_space<any>>) dst(%arg26 : memref<4x128xf32, #tpu.memory_space<vmem>>)
      %c4_i32_62 = arith.constant 4 : i32
      %121 = tpu.memref_slice %arg29[%c4_i32_62] : memref<8x!tpu.dma_semaphore, #tpu.memory_space<semaphore_mem>> -> memref<1x!tpu.dma_semaphore, #tpu.memory_space<semaphore_mem>>
      %122 = tpu.memref_squeeze %121 : memref<1x!tpu.dma_semaphore, #tpu.memory_space<semaphore_mem>> -> memref<!tpu.dma_semaphore, #tpu.memory_space<semaphore_mem>>
      tpu.wait_dma2 semaphore(%122 : memref<!tpu.dma_semaphore, #tpu.memory_space<semaphore_mem>>) src(%arg10 : memref<8x16xf32, #tpu.memory_space<any>>) dst(%arg21 : memref<8x16xf32, #tpu.memory_space<vmem>>)
      %c5_i32_63 = arith.constant 5 : i32
      %123 = tpu.memref_slice %arg29[%c5_i32_63] : memref<8x!tpu.dma_semaphore, #tpu.memory_space<semaphore_mem>> -> memref<1x!tpu.dma_semaphore, #tpu.memory_space<semaphore_mem>>
      %124 = tpu.memref_squeeze %123 : memref<1x!tpu.dma_semaphore, #tpu.memory_space<semaphore_mem>> -> memref<!tpu.dma_semaphore, #tpu.memory_space<semaphore_mem>>
      tpu.wait_dma2 semaphore(%124 : memref<!tpu.dma_semaphore, #tpu.memory_space<semaphore_mem>>) src(%arg11 : memref<8x128xf32, #tpu.memory_space<any>>) dst(%arg22 : memref<8x128xf32, #tpu.memory_space<vmem>>)
      %c6_i32_64 = arith.constant 6 : i32
      %125 = tpu.memref_slice %arg29[%c6_i32_64] : memref<8x!tpu.dma_semaphore, #tpu.memory_space<semaphore_mem>> -> memref<1x!tpu.dma_semaphore, #tpu.memory_space<semaphore_mem>>
      %126 = tpu.memref_squeeze %125 : memref<1x!tpu.dma_semaphore, #tpu.memory_space<semaphore_mem>> -> memref<!tpu.dma_semaphore, #tpu.memory_space<semaphore_mem>>
      tpu.wait_dma2 semaphore(%126 : memref<!tpu.dma_semaphore, #tpu.memory_space<semaphore_mem>>) src(%arg12 : memref<1x8xf32, #tpu.memory_space<any>>) dst(%arg23 : memref<1x8xf32, #tpu.memory_space<vmem>>)
      %c7_i32_65 = arith.constant 7 : i32
      %127 = tpu.memref_slice %arg29[%c7_i32_65] : memref<8x!tpu.dma_semaphore, #tpu.memory_space<semaphore_mem>> -> memref<1x!tpu.dma_semaphore, #tpu.memory_space<semaphore_mem>>
      %128 = tpu.memref_squeeze %127 : memref<1x!tpu.dma_semaphore, #tpu.memory_space<semaphore_mem>> -> memref<!tpu.dma_semaphore, #tpu.memory_space<semaphore_mem>>
      tpu.wait_dma2 semaphore(%128 : memref<!tpu.dma_semaphore, #tpu.memory_space<semaphore_mem>>) src(%arg13 : memref<1x8xf32, #tpu.memory_space<any>>) dst(%arg24 : memref<1x8xf32, #tpu.memory_space<vmem>>)
      %c0_66 = arith.constant 0 : index
      %129 = memref.load %arg1[%c0_66] : memref<1xi32, #tpu.memory_space<smem>>
      %c0_67 = arith.constant 0 : index
      %130 = memref.load %arg28[%c0_67] : memref<1xi32, #tpu.memory_space<smem>>
      memref.store %129, %arg28[%c0_67] : memref<1xi32, #tpu.memory_space<smem>>
    } else {
    }
    %c0 = arith.constant 0 : index
    %c0_1 = arith.constant 0 : index
    %3 = vector.load %arg4[%c0, %c0_1] : memref<4x16xf32, #tpu.memory_space<vmem>>, vector<4x16xf32>
    %c0_2 = arith.constant 0 : index
    %c0_3 = arith.constant 0 : index
    %4 = vector.load %arg19[%c0_2, %c0_3] : memref<16x640xf32, #tpu.memory_space<vmem>>, vector<16x640xf32>
    %cst = arith.constant dense<0.000000e+00> : vector<4x640xf32>
    %5 = tpu.matmul %3, %4, %cst {dimension_numbers = #tpu.dot_dimension_numbers<[1], [0], [0], [1], [0, 0, 1, 1], [], []>} : vector<4x16xf32>, vector<16x640xf32>, vector<4x640xf32> -> vector<4x640xf32>
    %c0_4 = arith.constant 0 : index
    %c0_5 = arith.constant 0 : index
    %6 = vector.load %arg5[%c0_4, %c0_5] : memref<1x640xf32, #tpu.memory_space<vmem>>, vector<1x640xf32>
    %7 = vector.broadcast %6 : vector<1x640xf32> to vector<4x640xf32>
    %8 = arith.addf %5, %7 : vector<4x640xf32>
    %c0_6 = arith.constant 0 : index
    %c0_7 = arith.constant 0 : index
    %9 = vector.load %arg27[%c0_6, %c0_7] : memref<4x640xf32, #tpu.memory_space<vmem>>, vector<4x640xf32>
    tpu.vector_store %arg27[%c0_6, %c0_7], %8 {strides = array<i32>} : memref<4x640xf32, #tpu.memory_space<vmem>>, vector<4x640xf32>,
    %c0_8 = arith.constant 0 : index
    %c0_9 = arith.constant 0 : index
    %10 = vector.load %arg20[%c0_8, %c0_9] : memref<128x640xf32, #tpu.memory_space<vmem>>, vector<128x640xf32>
    %c0_10 = arith.constant 0 : index
    %11 = memref.load %arg3[%c0_10] : memref<1xi32, #tpu.memory_space<smem>>
    %c0_11 = arith.constant 0 : index
    %12 = memref.load %arg2[%c0_11] : memref<1xi32, #tpu.memory_space<smem>>
    %c0_12 = arith.constant 0 : index
    %c0_13 = arith.constant 0 : index
    %13 = vector.load %arg25[%c0_12, %c0_13] : memref<4x128xf32, #tpu.memory_space<vmem>>, vector<4x128xf32>
    %c0_14 = arith.constant 0 : index
    %c0_15 = arith.constant 0 : index
    %14 = vector.load %arg26[%c0_14, %c0_15] : memref<4x128xf32, #tpu.memory_space<vmem>>, vector<4x128xf32>
    %c0_16 = arith.constant 0 : index
    %15 = memref.load %arg28[%c0_16] : memref<1xi32, #tpu.memory_space<smem>>
    %c0_i32_17 = arith.constant 0 : i32
    %c1_i32 = arith.constant 1 : i32
    %16 = arith.muli %arg0, %c1_i32 : i32
    %17 = arith.addi %16, %c0_i32_17 : i32
    %18 = arith.cmpi slt, %17, %11 : i32
    %c4_i32 = arith.constant 4 : i32
    %19 = arith.muli %c0_i32_17, %c4_i32 : i32
    %20 = arith.index_cast %19 : i32 to index
    %c0_18 = arith.constant 0 : index
    %21 = vector.load %arg4[%20, %c0_18] : memref<4x16xf32, #tpu.memory_space<vmem>>, vector<4x16xf32>
    %22 = arith.index_cast %19 : i32 to index
    %c0_19 = arith.constant 0 : index
    %23 = vector.load %arg27[%22, %c0_19] : memref<4x640xf32, #tpu.memory_space<vmem>>, vector<4x640xf32>
    %cst_20 = arith.constant dense<0.000000e+00> : vector<4x640xf32>
    %24 = tpu.matmul %13, %10, %cst_20 {dimension_numbers = #tpu.dot_dimension_numbers<[1], [0], [0], [1], [0, 0, 1, 1], [], []>} : vector<4x128xf32>, vector<128x640xf32>, vector<4x640xf32> -> vector<4x640xf32>
    %25 = arith.addf %23, %24 : vector<4x640xf32>
    %26 = vector.extract_strided_slice %25 {offsets = [0, 0], sizes = [4, 512], strides = [1, 1]} : vector<4x640xf32> to vector<4x512xf32>
    %27 = arith.negf %26 : vector<4x512xf32>
    %28 = math.exp %27 : vector<4x512xf32>
    %cst_21 = arith.constant 1.000000e+00 : f32
    %29 = vector.broadcast %cst_21 : f32 to vector<4x512xf32>
    %30 = arith.addf %29, %28 : vector<4x512xf32>
    %31 = arith.divf %29, %30 : vector<4x512xf32>
    %32 = vector.extract_strided_slice %31 {offsets = [0, 0], sizes = [4, 128], strides = [1, 1]} : vector<4x512xf32> to vector<4x128xf32>
    %33 = vector.extract_strided_slice %31 {offsets = [0, 128], sizes = [4, 128], strides = [1, 1]} : vector<4x512xf32> to vector<4x128xf32>
    %34 = vector.extract_strided_slice %31 {offsets = [0, 256], sizes = [4, 128], strides = [1, 1]} : vector<4x512xf32> to vector<4x128xf32>
    %35 = vector.extract_strided_slice %31 {offsets = [0, 384], sizes = [4, 128], strides = [1, 1]} : vector<4x512xf32> to vector<4x128xf32>
    %36 = vector.extract_strided_slice %25 {offsets = [0, 512], sizes = [4, 128], strides = [1, 1]} : vector<4x640xf32> to vector<4x128xf32>
    %37 = math.tanh %36 : vector<4x128xf32>
    %38 = arith.mulf %32, %14 : vector<4x128xf32>
    %39 = arith.mulf %33, %37 : vector<4x128xf32>
    %40 = arith.addf %38, %39 : vector<4x128xf32>
    %c0_22 = arith.constant 0 : index
    %c0_23 = arith.constant 0 : index
    %41 = vector.load %arg21[%c0_22, %c0_23] : memref<8x16xf32, #tpu.memory_space<vmem>>, vector<8x16xf32>
    %cst_24 = arith.constant dense<0.000000e+00> : vector<4x8xf32>
    %42 = tpu.matmul %21, %41, %cst_24 {dimension_numbers = #tpu.dot_dimension_numbers<[1], [1], [0], [0], [0, 0, 1, 0], [], []>} : vector<4x16xf32>, vector<8x16xf32>, vector<4x8xf32> -> vector<4x8xf32>
    %c0_25 = arith.constant 0 : index
    %c0_26 = arith.constant 0 : index
    %43 = vector.load %arg24[%c0_25, %c0_26] : memref<1x8xf32, #tpu.memory_space<vmem>>, vector<1x8xf32>
    %44 = vector.broadcast %43 : vector<1x8xf32> to vector<4x8xf32>
    %45 = arith.mulf %42, %44 : vector<4x8xf32>
    %c0_27 = arith.constant 0 : index
    %c0_28 = arith.constant 0 : index
    %46 = vector.load %arg23[%c0_27, %c0_28] : memref<1x8xf32, #tpu.memory_space<vmem>>, vector<1x8xf32>
    %cst_29 = arith.constant 5.000000e-01 : f32
    %47 = vector.broadcast %cst_29 : f32 to vector<1x8xf32>
    %48 = arith.cmpf ogt, %46, %47 : vector<1x8xf32>
    %cst_30 = arith.constant -1.000000e+30 : f32
    %49 = vector.shape_cast %48 : vector<1x8xi1> to vector<1x8xi1>
    %50 = vector.broadcast %49 : vector<1x8xi1> to vector<4x8xi1>
    %51 = vector.broadcast %cst_30 : f32 to vector<4x8xf32>
    %52 = arith.select %50, %45, %51 : vector<4x8xi1>, vector<4x8xf32>
    %53 = tpu.iota {dimensions = array<i32: 1>} : vector<4x8xi32>
    %cst_31 = arith.constant dense<0xFF800000> : vector<4xf32>
    %54 = vector.multi_reduction <maximumf>, %52, %cst_31 [1] : vector<4x8xf32> to vector<4xf32>
    %55 = vector.shape_cast %54 : vector<4xf32> to vector<4x1xf32>
    %56 = vector.broadcast %55 : vector<4x1xf32> to vector<4x8xf32>
    %57 = arith.cmpf oge, %52, %56 : vector<4x8xf32>
    %c8_i32 = arith.constant 8 : i32
    %58 = vector.broadcast %c8_i32 : i32 to vector<4x8xi32>
    %59 = arith.select %57, %53, %58 : vector<4x8xi1>, vector<4x8xi32>
    %cst_32 = arith.constant dense<2147483647> : vector<4xi32>
    %60 = vector.multi_reduction <minsi>, %59, %cst_32 [1] : vector<4x8xi32> to vector<4xi32>
    %61 = vector.shape_cast %60 : vector<4xi32> to vector<4x1xi32>
    %62 = vector.broadcast %61 : vector<4x1xi32> to vector<4x8xi32>
    %63 = arith.cmpi eq, %53, %62 : vector<4x8xi32>
    %64 = arith.extui %63 : vector<4x8xi1> to vector<4x8xi32>
    %65 = arith.sitofp %64 : vector<4x8xi32> to vector<4x8xf32>
    %c0_33 = arith.constant 0 : index
    %c0_34 = arith.constant 0 : index
    %66 = vector.load %arg22[%c0_33, %c0_34] : memref<8x128xf32, #tpu.memory_space<vmem>>, vector<8x128xf32>
    %cst_35 = arith.constant dense<0.000000e+00> : vector<4x128xf32>
    %67 = tpu.matmul %65, %66, %cst_35 {dimension_numbers = #tpu.dot_dimension_numbers<[1], [0], [0], [1], [0, 0, 1, 1], [], []>} : vector<4x8xf32>, vector<8x128xf32>, vector<4x128xf32> -> vector<4x128xf32>
    %c0_i32_36 = arith.constant 0 : i32
    %68 = arith.cmpi sgt, %12, %c0_i32_36 : i32
    %c0_i32_37 = arith.constant 0 : i32
    %69 = arith.cmpi sgt, %17, %c0_i32_37 : i32
    %70 = arith.ori %68, %69 : i1
    %cst_38 = arith.constant 1.000000e+00 : f32
    %cst_39 = arith.constant 0.000000e+00 : f32
    %71 = arith.select %70, %cst_38, %cst_39 : f32
    %72 = math.tanh %67 : vector<4x128xf32>
    %73 = vector.broadcast %71 : f32 to vector<4x128xf32>
    %74 = arith.mulf %72, %73 : vector<4x128xf32>
    %75 = arith.mulf %35, %74 : vector<4x128xf32>
    %76 = arith.addf %40, %75 : vector<4x128xf32>
    %77 = math.tanh %76 : vector<4x128xf32>
    %78 = arith.mulf %34, %77 : vector<4x128xf32>
    %79 = arith.index_cast %19 : i32 to index
    %c0_40 = arith.constant 0 : index
    %80 = vector.load %arg14[%79, %c0_40] : memref<4x128xf32, #tpu.memory_space<vmem>>, vector<4x128xf32>
    tpu.vector_store %arg14[%79, %c0_40], %78 {strides = array<i32>} : memref<4x128xf32, #tpu.memory_space<vmem>>, vector<4x128xf32>,
    %81 = arith.extui %18 : i1 to i32
    %c0_i32_41 = arith.constant 0 : i32
    %82 = arith.cmpi ne, %81, %c0_i32_41 : i32
    scf.if %82 {
      %c0_i32_55 = arith.constant 0 : i32
      %97 = arith.addi %15, %c0_i32_55 : i32
      %c8_i32_56 = arith.constant 8 : i32
      %98 = arith.cmpi sge, %97, %c8_i32_56 : i32
      %c8_i32_57 = arith.constant 8 : i32
      %99 = arith.subi %97, %c8_i32_57 : i32
      %100 = arith.select %98, %99, %97 : i32
      %101 = vector.extract_strided_slice %21 {offsets = [0, 0], sizes = [1, 16], strides = [1, 1]} : vector<4x16xf32> to vector<1x16xf32>
      %102 = arith.index_cast %100 : i32 to index
      %c0_58 = arith.constant 0 : index
      %103 = vector.load %arg21[%102, %c0_58] : memref<8x16xf32, #tpu.memory_space<vmem>>, vector<1x16xf32>
      tpu.vector_store %arg21[%102, %c0_58], %101 {strides = array<i32>} : memref<8x16xf32, #tpu.memory_space<vmem>>, vector<1x16xf32>,
      %104 = vector.extract_strided_slice %76 {offsets = [0, 0], sizes = [1, 128], strides = [1, 1]} : vector<4x128xf32> to vector<1x128xf32>
      %105 = arith.index_cast %100 : i32 to index
      %c0_59 = arith.constant 0 : index
      %106 = vector.load %arg22[%105, %c0_59] : memref<8x128xf32, #tpu.memory_space<vmem>>, vector<1x128xf32>
      tpu.vector_store %arg22[%105, %c0_59], %104 {strides = array<i32>} : memref<8x128xf32, #tpu.memory_space<vmem>>, vector<1x128xf32>,
      %c1_i32_60 = arith.constant 1 : i32
      %107 = arith.addi %15, %c1_i32_60 : i32
      %c8_i32_61 = arith.constant 8 : i32
      %108 = arith.cmpi sge, %107, %c8_i32_61 : i32
      %c8_i32_62 = arith.constant 8 : i32
      %109 = arith.subi %107, %c8_i32_62 : i32
      %110 = arith.select %108, %109, %107 : i32
      %111 = vector.extract_strided_slice %21 {offsets = [1, 0], sizes = [1, 16], strides = [1, 1]} : vector<4x16xf32> to vector<1x16xf32>
      %112 = arith.index_cast %110 : i32 to index
      %c0_63 = arith.constant 0 : index
      %113 = vector.load %arg21[%112, %c0_63] : memref<8x16xf32, #tpu.memory_space<vmem>>, vector<1x16xf32>
      tpu.vector_store %arg21[%112, %c0_63], %111 {strides = array<i32>} : memref<8x16xf32, #tpu.memory_space<vmem>>, vector<1x16xf32>,
      %114 = vector.extract_strided_slice %76 {offsets = [1, 0], sizes = [1, 128], strides = [1, 1]} : vector<4x128xf32> to vector<1x128xf32>
      %115 = arith.index_cast %110 : i32 to index
      %c0_64 = arith.constant 0 : index
      %116 = vector.load %arg22[%115, %c0_64] : memref<8x128xf32, #tpu.memory_space<vmem>>, vector<1x128xf32>
      tpu.vector_store %arg22[%115, %c0_64], %114 {strides = array<i32>} : memref<8x128xf32, #tpu.memory_space<vmem>>, vector<1x128xf32>,
      %c2_i32 = arith.constant 2 : i32
      %117 = arith.addi %15, %c2_i32 : i32
      %c8_i32_65 = arith.constant 8 : i32
      %118 = arith.cmpi sge, %117, %c8_i32_65 : i32
      %c8_i32_66 = arith.constant 8 : i32
      %119 = arith.subi %117, %c8_i32_66 : i32
      %120 = arith.select %118, %119, %117 : i32
      %121 = vector.extract_strided_slice %21 {offsets = [2, 0], sizes = [1, 16], strides = [1, 1]} : vector<4x16xf32> to vector<1x16xf32>
      %122 = arith.index_cast %120 : i32 to index
      %c0_67 = arith.constant 0 : index
      %123 = vector.load %arg21[%122, %c0_67] : memref<8x16xf32, #tpu.memory_space<vmem>>, vector<1x16xf32>
      tpu.vector_store %arg21[%122, %c0_67], %121 {strides = array<i32>} : memref<8x16xf32, #tpu.memory_space<vmem>>, vector<1x16xf32>,
      %124 = vector.extract_strided_slice %76 {offsets = [2, 0], sizes = [1, 128], strides = [1, 1]} : vector<4x128xf32> to vector<1x128xf32>
      %125 = arith.index_cast %120 : i32 to index
      %c0_68 = arith.constant 0 : index
      %126 = vector.load %arg22[%125, %c0_68] : memref<8x128xf32, #tpu.memory_space<vmem>>, vector<1x128xf32>
      tpu.vector_store %arg22[%125, %c0_68], %124 {strides = array<i32>} : memref<8x128xf32, #tpu.memory_space<vmem>>, vector<1x128xf32>,
      %c3_i32 = arith.constant 3 : i32
      %127 = arith.addi %15, %c3_i32 : i32
      %c8_i32_69 = arith.constant 8 : i32
      %128 = arith.cmpi sge, %127, %c8_i32_69 : i32
      %c8_i32_70 = arith.constant 8 : i32
      %129 = arith.subi %127, %c8_i32_70 : i32
      %130 = arith.select %128, %129, %127 : i32
      %131 = vector.extract_strided_slice %21 {offsets = [3, 0], sizes = [1, 16], strides = [1, 1]} : vector<4x16xf32> to vector<1x16xf32>
      %132 = arith.index_cast %130 : i32 to index
      %c0_71 = arith.constant 0 : index
      %133 = vector.load %arg21[%132, %c0_71] : memref<8x16xf32, #tpu.memory_space<vmem>>, vector<1x16xf32>
      tpu.vector_store %arg21[%132, %c0_71], %131 {strides = array<i32>} : memref<8x16xf32, #tpu.memory_space<vmem>>, vector<1x16xf32>,
      %134 = vector.extract_strided_slice %76 {offsets = [3, 0], sizes = [1, 128], strides = [1, 1]} : vector<4x128xf32> to vector<1x128xf32>
      %135 = arith.index_cast %130 : i32 to index
      %c0_72 = arith.constant 0 : index
      %136 = vector.load %arg22[%135, %c0_72] : memref<8x128xf32, #tpu.memory_space<vmem>>, vector<1x128xf32>
      tpu.vector_store %arg22[%135, %c0_72], %134 {strides = array<i32>} : memref<8x128xf32, #tpu.memory_space<vmem>>, vector<1x128xf32>,
      %137 = tpu.iota {dimensions = array<i32: 1>} : vector<1x8xi32>
      %138 = vector.broadcast %15 : i32 to vector<1x8xi32>
      %139 = arith.subi %137, %138 : vector<1x8xi32>
      %c0_i32_73 = arith.constant 0 : i32
      %140 = vector.broadcast %c0_i32_73 : i32 to vector<1x8xi32>
      %141 = arith.cmpi slt, %139, %140 : vector<1x8xi32>
      %c8_i32_74 = arith.constant 8 : i32
      %142 = vector.broadcast %c8_i32_74 : i32 to vector<1x8xi32>
      %143 = arith.addi %139, %142 : vector<1x8xi32>
      %144 = arith.select %141, %143, %139 : vector<1x8xi1>, vector<1x8xi32>
      %c4_i32_75 = arith.constant 4 : i32
      %145 = vector.broadcast %c4_i32_75 : i32 to vector<1x8xi32>
      %146 = arith.cmpi slt, %144, %145 : vector<1x8xi32>
      %147 = arith.mulf %21, %21 : vector<4x16xf32>
      %cst_76 = arith.constant dense<0.000000e+00> : vector<4xf32>
      %148 = vector.multi_reduction <add>, %147, %cst_76 [1] : vector<4x16xf32> to vector<4xf32>
      %149 = vector.shape_cast %148 : vector<4xf32> to vector<4x1xf32>
      %cst_77 = arith.constant 9.99999996E-13 : f32
      %150 = vector.broadcast %cst_77 : f32 to vector<4x1xf32>
      %151 = arith.maximumf %149, %150 : vector<4x1xf32>
      %152 = math.rsqrt %151 : vector<4x1xf32>
      %cst_78 = arith.constant 0.000000e+00 : f32
      %153 = vector.broadcast %cst_78 : f32 to vector<1x8xf32>
      %c0_i32_79 = arith.constant 0 : i32
      %154 = vector.broadcast %c0_i32_79 : i32 to vector<1x8xi32>
      %155 = arith.cmpi eq, %144, %154 : vector<1x8xi32>
      %156 = vector.extract_strided_slice %152 {offsets = [0, 0], sizes = [1, 1], strides = [1, 1]} : vector<4x1xf32> to vector<1x1xf32>
      %cst_80 = arith.constant 0.000000e+00 : f32
      %157 = vector.shape_cast %156 : vector<1x1xf32> to vector<1x1xf32>
      %158 = vector.broadcast %157 : vector<1x1xf32> to vector<1x8xf32>
      %159 = vector.broadcast %cst_80 : f32 to vector<1x8xf32>
      %160 = arith.select %155, %158, %159 : vector<1x8xi1>, vector<1x8xf32>
      %161 = arith.addf %153, %160 : vector<1x8xf32>
      %c1_i32_81 = arith.constant 1 : i32
      %162 = vector.broadcast %c1_i32_81 : i32 to vector<1x8xi32>
      %163 = arith.cmpi eq, %144, %162 : vector<1x8xi32>
      %164 = vector.extract_strided_slice %152 {offsets = [1, 0], sizes = [1, 1], strides = [1, 1]} : vector<4x1xf32> to vector<1x1xf32>
      %cst_82 = arith.constant 0.000000e+00 : f32
      %165 = vector.shape_cast %164 : vector<1x1xf32> to vector<1x1xf32>
      %166 = vector.broadcast %165 : vector<1x1xf32> to vector<1x8xf32>
      %167 = vector.broadcast %cst_82 : f32 to vector<1x8xf32>
      %168 = arith.select %163, %166, %167 : vector<1x8xi1>, vector<1x8xf32>
      %169 = arith.addf %161, %168 : vector<1x8xf32>
      %c2_i32_83 = arith.constant 2 : i32
      %170 = vector.broadcast %c2_i32_83 : i32 to vector<1x8xi32>
      %171 = arith.cmpi eq, %144, %170 : vector<1x8xi32>
      %172 = vector.extract_strided_slice %152 {offsets = [2, 0], sizes = [1, 1], strides = [1, 1]} : vector<4x1xf32> to vector<1x1xf32>
      %cst_84 = arith.constant 0.000000e+00 : f32
      %173 = vector.shape_cast %172 : vector<1x1xf32> to vector<1x1xf32>
      %174 = vector.broadcast %173 : vector<1x1xf32> to vector<1x8xf32>
      %175 = vector.broadcast %cst_84 : f32 to vector<1x8xf32>
      %176 = arith.select %171, %174, %175 : vector<1x8xi1>, vector<1x8xf32>
      %177 = arith.addf %169, %176 : vector<1x8xf32>
      %c3_i32_85 = arith.constant 3 : i32
      %178 = vector.broadcast %c3_i32_85 : i32 to vector<1x8xi32>
      %179 = arith.cmpi eq, %144, %178 : vector<1x8xi32>
      %180 = vector.extract_strided_slice %152 {offsets = [3, 0], sizes = [1, 1], strides = [1, 1]} : vector<4x1xf32> to vector<1x1xf32>
      %cst_86 = arith.constant 0.000000e+00 : f32
      %181 = vector.shape_cast %180 : vector<1x1xf32> to vector<1x1xf32>
      %182 = vector.broadcast %181 : vector<1x1xf32> to vector<1x8xf32>
      %183 = vector.broadcast %cst_86 : f32 to vector<1x8xf32>
      %184 = arith.select %179, %182, %183 : vector<1x8xi1>, vector<1x8xf32>
      %185 = arith.addf %177, %184 : vector<1x8xf32>
      %c0_87 = arith.constant 0 : index
      %c0_88 = arith.constant 0 : index
      %186 = vector.load %arg24[%c0_87, %c0_88] : memref<1x8xf32, #tpu.memory_space<vmem>>, vector<1x8xf32>
      %187 = arith.select %146, %185, %186 : vector<1x8xi1>, vector<1x8xf32>
      %c0_89 = arith.constant 0 : index
      %c0_90 = arith.constant 0 : index
      %188 = vector.load %arg24[%c0_89, %c0_90] : memref<1x8xf32, #tpu.memory_space<vmem>>, vector<1x8xf32>
      tpu.vector_store %arg24[%c0_89, %c0_90], %187 {strides = array<i32>} : memref<1x8xf32, #tpu.memory_space<vmem>>, vector<1x8xf32>,
      %c0_91 = arith.constant 0 : index
      %c0_92 = arith.constant 0 : index
      %189 = vector.load %arg23[%c0_91, %c0_92] : memref<1x8xf32, #tpu.memory_space<vmem>>, vector<1x8xf32>
      %cst_93 = arith.constant 1.000000e+00 : f32
      %190 = vector.broadcast %cst_93 : f32 to vector<1x8xf32>
      %191 = arith.select %146, %190, %189 : vector<1x8xi1>, vector<1x8xf32>
      %c0_94 = arith.constant 0 : index
      %c0_95 = arith.constant 0 : index
      %192 = vector.load %arg23[%c0_94, %c0_95] : memref<1x8xf32, #tpu.memory_space<vmem>>, vector<1x8xf32>
      tpu.vector_store %arg23[%c0_94, %c0_95], %191 {strides = array<i32>} : memref<1x8xf32, #tpu.memory_space<vmem>>, vector<1x8xf32>,
    } else {
    }
    %c4_i32_42 = arith.constant 4 : i32
    %83 = arith.addi %15, %c4_i32_42 : i32
    %c8_i32_43 = arith.constant 8 : i32
    %84 = arith.cmpi sge, %83, %c8_i32_43 : i32
    %c8_i32_44 = arith.constant 8 : i32
    %85 = arith.subi %83, %c8_i32_44 : i32
    %86 = arith.select %84, %85, %83 : i32
    %87 = arith.select %18, %78, %13 : vector<4x128xf32>
    %88 = arith.select %18, %76, %14 : vector<4x128xf32>
    %89 = arith.select %18, %86, %15 : i32
    %c1_i32_45 = arith.constant 1 : i32
    %c0_46 = arith.constant 0 : index
    %c0_47 = arith.constant 0 : index
    %90 = vector.load %arg25[%c0_46, %c0_47] : memref<4x128xf32, #tpu.memory_space<vmem>>, vector<4x128xf32>
    tpu.vector_store %arg25[%c0_46, %c0_47], %87 {strides = array<i32>} : memref<4x128xf32, #tpu.memory_space<vmem>>, vector<4x128xf32>,
    %c0_48 = arith.constant 0 : index
    %c0_49 = arith.constant 0 : index
    %91 = vector.load %arg26[%c0_48, %c0_49] : memref<4x128xf32, #tpu.memory_space<vmem>>, vector<4x128xf32>
    tpu.vector_store %arg26[%c0_48, %c0_49], %88 {strides = array<i32>} : memref<4x128xf32, #tpu.memory_space<vmem>>, vector<4x128xf32>,
    %c0_50 = arith.constant 0 : index
    %92 = memref.load %arg28[%c0_50] : memref<1xi32, #tpu.memory_space<smem>>
    memref.store %89, %arg28[%c0_50] : memref<1xi32, #tpu.memory_space<smem>>
    %c0_51 = arith.constant 0 : index
    %c0_52 = arith.constant 0 : index
    %93 = vector.load %arg15[%c0_51, %c0_52] : memref<4x128xf32, #tpu.memory_space<vmem>>, vector<4x128xf32>
    tpu.vector_store %arg15[%c0_51, %c0_52], %88 {strides = array<i32>} : memref<4x128xf32, #tpu.memory_space<vmem>>, vector<4x128xf32>,
    %c0_i32_53 = arith.constant 0 : i32
    %94 = arith.cmpi eq, %arg0, %c0_i32_53 : i32
    %95 = arith.extui %94 : i1 to i32
    %c0_i32_54 = arith.constant 0 : i32
    %96 = arith.cmpi ne, %95, %c0_i32_54 : i32
    scf.if %96 {
      %c0_i32_55 = arith.constant 0 : i32
      %97 = tpu.memref_slice %arg29[%c0_i32_55] : memref<8x!tpu.dma_semaphore, #tpu.memory_space<semaphore_mem>> -> memref<1x!tpu.dma_semaphore, #tpu.memory_space<semaphore_mem>>
      %98 = tpu.memref_squeeze %97 : memref<1x!tpu.dma_semaphore, #tpu.memory_space<semaphore_mem>> -> memref<!tpu.dma_semaphore, #tpu.memory_space<semaphore_mem>>
      tpu.enqueue_dma source(%arg21 : memref<8x16xf32, #tpu.memory_space<vmem>>) target(%arg16 : memref<8x16xf32, #tpu.memory_space<any>>) target_semaphore(%98 : memref<!tpu.dma_semaphore, #tpu.memory_space<semaphore_mem>>)
      %c1_i32_56 = arith.constant 1 : i32
      %99 = tpu.memref_slice %arg29[%c1_i32_56] : memref<8x!tpu.dma_semaphore, #tpu.memory_space<semaphore_mem>> -> memref<1x!tpu.dma_semaphore, #tpu.memory_space<semaphore_mem>>
      %100 = tpu.memref_squeeze %99 : memref<1x!tpu.dma_semaphore, #tpu.memory_space<semaphore_mem>> -> memref<!tpu.dma_semaphore, #tpu.memory_space<semaphore_mem>>
      tpu.enqueue_dma source(%arg22 : memref<8x128xf32, #tpu.memory_space<vmem>>) target(%arg17 : memref<8x128xf32, #tpu.memory_space<any>>) target_semaphore(%100 : memref<!tpu.dma_semaphore, #tpu.memory_space<semaphore_mem>>)
      %c2_i32 = arith.constant 2 : i32
      %101 = tpu.memref_slice %arg29[%c2_i32] : memref<8x!tpu.dma_semaphore, #tpu.memory_space<semaphore_mem>> -> memref<1x!tpu.dma_semaphore, #tpu.memory_space<semaphore_mem>>
      %102 = tpu.memref_squeeze %101 : memref<1x!tpu.dma_semaphore, #tpu.memory_space<semaphore_mem>> -> memref<!tpu.dma_semaphore, #tpu.memory_space<semaphore_mem>>
      tpu.enqueue_dma source(%arg23 : memref<1x8xf32, #tpu.memory_space<vmem>>) target(%arg18 : memref<1x8xf32, #tpu.memory_space<any>>) target_semaphore(%102 : memref<!tpu.dma_semaphore, #tpu.memory_space<semaphore_mem>>)
      %c0_i32_57 = arith.constant 0 : i32
      %103 = tpu.memref_slice %arg29[%c0_i32_57] : memref<8x!tpu.dma_semaphore, #tpu.memory_space<semaphore_mem>> -> memref<1x!tpu.dma_semaphore, #tpu.memory_space<semaphore_mem>>
      %104 = tpu.memref_squeeze %103 : memref<1x!tpu.dma_semaphore, #tpu.memory_space<semaphore_mem>> -> memref<!tpu.dma_semaphore, #tpu.memory_space<semaphore_mem>>
      tpu.wait_dma2 semaphore(%104 : memref<!tpu.dma_semaphore, #tpu.memory_space<semaphore_mem>>) src(%arg21 : memref<8x16xf32, #tpu.memory_space<vmem>>) dst(%arg16 : memref<8x16xf32, #tpu.memory_space<any>>)
      %c1_i32_58 = arith.constant 1 : i32
      %105 = tpu.memref_slice %arg29[%c1_i32_58] : memref<8x!tpu.dma_semaphore, #tpu.memory_space<semaphore_mem>> -> memref<1x!tpu.dma_semaphore, #tpu.memory_space<semaphore_mem>>
      %106 = tpu.memref_squeeze %105 : memref<1x!tpu.dma_semaphore, #tpu.memory_space<semaphore_mem>> -> memref<!tpu.dma_semaphore, #tpu.memory_space<semaphore_mem>>
      tpu.wait_dma2 semaphore(%106 : memref<!tpu.dma_semaphore, #tpu.memory_space<semaphore_mem>>) src(%arg22 : memref<8x128xf32, #tpu.memory_space<vmem>>) dst(%arg17 : memref<8x128xf32, #tpu.memory_space<any>>)
      %c2_i32_59 = arith.constant 2 : i32
      %107 = tpu.memref_slice %arg29[%c2_i32_59] : memref<8x!tpu.dma_semaphore, #tpu.memory_space<semaphore_mem>> -> memref<1x!tpu.dma_semaphore, #tpu.memory_space<semaphore_mem>>
      %108 = tpu.memref_squeeze %107 : memref<1x!tpu.dma_semaphore, #tpu.memory_space<semaphore_mem>> -> memref<!tpu.dma_semaphore, #tpu.memory_space<semaphore_mem>>
      tpu.wait_dma2 semaphore(%108 : memref<!tpu.dma_semaphore, #tpu.memory_space<semaphore_mem>>) src(%arg23 : memref<1x8xf32, #tpu.memory_space<vmem>>) dst(%arg18 : memref<1x8xf32, #tpu.memory_space<any>>)
    } else {
    }
    return
  }
  func.func @transform_0(%arg0: i32) -> i32 {
    %c0_i32 = arith.constant 0 : i32
    %c0_i32_0 = arith.constant 0 : i32
    return %c0_i32 : i32
  }
  func.func @transform_1(%arg0: i32) -> i32 {
    %c0_i32 = arith.constant 0 : i32
    %c0_i32_0 = arith.constant 0 : i32
    return %c0_i32 : i32
  }
  func.func @transform_2(%arg0: i32) -> i32 {
    %c0_i32 = arith.constant 0 : i32
    %c0_i32_0 = arith.constant 0 : i32
    return %c0_i32 : i32
  }
  func.func @transform_3(%arg0: i32) -> (i32, i32) {
    %c0_i32 = arith.constant 0 : i32
    %c0_i32_0 = arith.constant 0 : i32
    return %arg0, %c0_i32 : i32, i32
  }
  func.func @transform_4(%arg0: i32) -> (i32, i32) {
    %c0_i32 = arith.constant 0 : i32
    %c0_i32_0 = arith.constant 0 : i32
    %c0_i32_1 = arith.constant 0 : i32
    return %c0_i32, %c0_i32_0 : i32, i32
  }
  func.func @transform_13(%arg0: i32) -> (i32, i32) {
    %c0_i32 = arith.constant 0 : i32
    %c0_i32_0 = arith.constant 0 : i32
    return %arg0, %c0_i32 : i32, i32
  }
  func.func @transform_14(%arg0: i32) -> (i32, i32) {
    %c0_i32 = arith.constant 0 : i32
    %c0_i32_0 = arith.constant 0 : i32
    %c0_i32_1 = arith.constant 0 : i32
    return %c0_i32, %c0_i32_0 : i32, i32
  }
}

</mosaic_0001>

<llo_original>
// kernel: dnd_lstm_sequence.1
$region0: #{dnd_lstm_sequence.1}
  #allocation0 [shape = 'u32[]', space=smem, size = 0x4, offset = 0x4, fixed_abs, tag = 'smem constant byte address 0x4 - core index']
  #allocation1 [shape = 'u32[144,128]{1,0:T(1,128)}', space=vmem, size = 0x12000, scoped, tag = 'internal scratch']
  #allocation2 [shape = 'f32[16,640]{1,0:T(8,128)}', space=vmem, size = 0xa000, scoped, tag = 'scratch operand']
  #allocation3 [shape = 'f32[128,640]{1,0:T(8,128)}', space=vmem, size = 0x50000, scoped, tag = 'scratch operand']
  #allocation4 [shape = 'f32[8,16]{1,0:T(8,128)}', space=vmem, size = 0x1000, scoped, tag = 'scratch operand']
  #allocation5 [shape = 'f32[8,128]{1,0:T(8,128)}', space=vmem, size = 0x1000, scoped, tag = 'scratch operand']
  #allocation6 [shape = 'f32[1,8]{1,0:T(1,128)}', space=vmem, size = 0x200, scoped, tag = 'scratch operand']
  #allocation7 [shape = 'f32[1,8]{1,0:T(1,128)}', space=vmem, size = 0x200, scoped, tag = 'scratch operand']
  #allocation8 [shape = 'f32[4,128]{1,0:T(4,128)}', space=vmem, size = 0x800, scoped, tag = 'scratch operand']
  #allocation9 [shape = 'f32[4,128]{1,0:T(4,128)}', space=vmem, size = 0x800, scoped, tag = 'scratch operand']
  #allocation10 [shape = 'f32[4,640]{1,0:T(4,128)}', space=vmem, size = 0x2800, scoped, tag = 'scratch operand']
  #allocation11 [shape = 's32[1]{0:T(128)}', space=smem, size = 0x200, scoped, tag = 'scratch operand']
  #allocation12 [shape = 's32[8]{0}', space=sflag, size = 0x20, scoped, tag = 'scratch operand']
  #allocation13 [shape = 's32[1]{0:T(128)S(6)}', space=smem, size = 0x200, scoped, tag = 'scoped memory for dnd_lstm_sequence.1']
  #allocation14 [shape = 's32[1]{0:T(128)S(6)}', space=smem, size = 0x200, scoped, tag = 'scoped memory for dnd_lstm_sequence.1']
  #allocation15 [shape = 's32[1]{0:T(128)S(6)}', space=smem, size = 0x200, scoped, tag = 'scoped memory for dnd_lstm_sequence.1']
  #allocation20 [shape = 's32[]', space=sflag, size = 0x4, offset = 0, fixed_abs, tag = 'sflag constant byte address 0x0 - dummy sync flag']
  #allocation21 [shape = 's32[]', space=sflag, size = 0x4, offset = 0, fixed_abs, tag = 'sflag constant byte address 0x0 - dummy sync flag']
  #allocation22 [shape = 's32[]', space=sflag, size = 0x4, offset = 0, fixed_abs, tag = 'sflag constant byte address 0x0 - dummy sync flag']
  #allocation23 [shape = 'u32[]', space=smem, size = 0x4, offset = 0x44, fixed_abs, tag = 'smem constant byte address 0x44 - assertion arg 0']
  #allocation24 [shape = 'u32[]', space=smem, size = 0x4, offset = 0x48, fixed_abs, tag = 'smem constant byte address 0x48 - assertion arg 1']
  #allocation25 [shape = 's32[]', space=sflag, size = 0x4, offset = 0, fixed_abs, tag = 'sflag constant byte address 0x0 - dummy sync flag']
  #allocation26 [shape = 's32[]', space=sflag, size = 0x4, offset = 0, fixed_abs, tag = 'sflag constant byte address 0x0 - dummy sync flag']
  #allocation27 [shape = 's32[]', space=sflag, size = 0x4, offset = 0, fixed_abs, tag = 'sflag constant byte address 0x0 - dummy sync flag']
  #allocation28 [shape = 's32[]', space=sflag, size = 0x4, offset = 0, fixed_abs, tag = 'sflag constant byte address 0x0 - dummy sync flag']
  #allocation29 [shape = 's32[]', space=sflag, size = 0x4, offset = 0, fixed_abs, tag = 'sflag constant byte address 0x0 - dummy sync flag']
  #allocation30 [shape = 's32[]', space=sflag, size = 0x4, offset = 0, fixed_abs, tag = 'sflag constant byte address 0x0 - dummy sync flag']
  #allocation31 [shape = 's32[]', space=sflag, size = 0x4, offset = 0, fixed_abs, tag = 'sflag constant byte address 0x0 - dummy sync flag']
  #allocation32 [shape = 's32[]', space=sflag, size = 0x4, offset = 0, fixed_abs, tag = 'sflag constant byte address 0x0 - dummy sync flag']
  #allocation33 [shape = 's32[]', space=sflag, size = 0x4, offset = 0, fixed_abs, tag = 'sflag constant byte address 0x0 - dummy sync flag']
  %s0 = inlined_call_operand.<no memory space> [shape: s32[1], index: 0, kind: input, shape index: {}]
  %s1 = inlined_call_operand.<no memory space> [shape: s32[1], index: 1, kind: input, shape index: {}]
  %s2 = inlined_call_operand.<no memory space> [shape: s32[1], index: 2, kind: input, shape index: {}]
  %s3 = inlined_call_operand.vmem [shape: f32[4,16], index: 3, kind: input, shape index: {}]
  %s4 = inlined_call_operand.vmem [shape: f32[1,640], index: 4, kind: input, shape index: {}]
  %s5 = inlined_call_operand.vmem [shape: f32[16,640], index: 5, kind: input, shape index: {}]
  %s6 = inlined_call_operand.hbm [shape: f32[128,640], index: 6, kind: input, shape index: {}]
  %s7 = inlined_call_operand.vmem [shape: f32[4,128], index: 7, kind: input, shape index: {}]
  %s8 = inlined_call_operand.vmem [shape: f32[4,128], index: 8, kind: input, shape index: {}]
  %s9 = inlined_call_operand.vmem [shape: f32[8,16], index: 9, kind: input, shape index: {}, may-alias: {9,15}]
  %s10 = inlined_call_operand.vmem [shape: f32[8,128], index: 10, kind: input, shape index: {}, may-alias: {10,16}]
  %s11 = inlined_call_operand.vmem [shape: f32[1,8], index: 11, kind: input, shape index: {}, may-alias: {11,17}]
  %s12 = inlined_call_operand.vmem [shape: f32[1,8], index: 12, kind: input, shape index: {}]
  %s13 = inlined_call_operand.hbm [shape: f32[4,128], index: 13, kind: output, shape index: {0}]
  %s14 = inlined_call_operand.hbm [shape: f32[4,128], index: 14, kind: output, shape index: {1}]
  %s15 = inlined_call_operand.vmem [shape: f32[8,16], index: 15, kind: output, shape index: {2}, may-alias: {9,15}]
  %s16 = inlined_call_operand.vmem [shape: f32[8,128], index: 16, kind: output, shape index: {3}, may-alias: {10,16}]
  %s17 = inlined_call_operand.vmem [shape: f32[1,8], index: 17, kind: output, shape index: {4}, may-alias: {11,17}]
  %18 = xla_tuple %s13, %s14, %s15, %s16, %s17
  %s19 = sld [smem:[#allocation0]]
  $region374: #{dnd_lstm_sequence.1} parent=0
    _
  %s21 = ssub.s32 1, %s19
  %s22 = scalar_select 0, %s21, %s19
  %23 = sst [smem:[#allocation13]] %s0
  %24 = sst [smem:[#allocation14]] %s1
  %25 = sst [smem:[#allocation15]] %s2
  $region1: #{dnd_lstm_sequence.1} parent=0
    #allocation16 [shape = 'u8[2048]{0}', space=vmem, size = 0x800, scoped, tag = 'output window, operand 0, single buffered']
    #allocation17 [shape = 's32[1]{0}', space=sflag, size = 0x4, scoped, tag = 'scoped memory for dnd_lstm_sequence.1']
    #allocation18 [shape = 'u8[2048]{0}', space=vmem, size = 0x800, scoped, tag = 'output window, operand 1, single buffered']
    #allocation19 [shape = 's32[1]{0}', space=sflag, size = 0x4, scoped, tag = 'scoped memory for dnd_lstm_sequence.1']
    %26 = vsyncpa [#allocation17], 0
    %27 = vsyncpa [#allocation19], 0
    // Predicated region
    $region2: #{dnd_lstm_sequence.1} parent=1 // pred_check
      _
    $region3: #{dnd_lstm_sequence.1} parent=1 // pred_check_branch
      %29 = sbr.rel (0) target = $region5
    $region4: #{dnd_lstm_sequence.1} parent=1 // pred_region
      _
    $region5: #{dnd_lstm_sequence.1} parent=1 // pred_fallthru
      _
    // Predicated region
    $region6: #{dnd_lstm_sequence.1} parent=1 // pred_check
      _
    $region7: #{dnd_lstm_sequence.1} parent=1 // pred_check_branch
      %31 = sbr.rel (0) target = $region9
    $region8: #{dnd_lstm_sequence.1} parent=1 // pred_region
      _
    $region9: #{dnd_lstm_sequence.1} parent=1 // pred_fallthru
      _
    // Predicated region
    $region10: #{dnd_lstm_sequence.1} parent=1 // pred_check
      _
    $region11: #{dnd_lstm_sequence.1} parent=1 // pred_check_branch
      %33 = sbr.rel (0) target = $region13
    $region12: #{dnd_lstm_sequence.1} parent=1 // pred_region
      _
    $region13: #{dnd_lstm_sequence.1} parent=1 // pred_fallthru
      _
    // Predicated region
    $region14: #{dnd_lstm_sequence.1} parent=1 // pred_check
      _
    $region15: #{dnd_lstm_sequence.1} parent=1 // pred_check_branch
      %35 = sbr.rel (0) target = $region17
    $region16: #{dnd_lstm_sequence.1} parent=1 // pred_region
      _
    $region17: #{dnd_lstm_sequence.1} parent=1 // pred_fallthru
      _
    // Predicated region
    $region18: #{dnd_lstm_sequence.1} parent=1 // pred_check
      _
    $region19: #{dnd_lstm_sequence.1} parent=1 // pred_check_branch
      %37 = sbr.rel (0) target = $region21
    $region20: #{dnd_lstm_sequence.1} parent=1 // pred_region
      _
    $region21: #{dnd_lstm_sequence.1} parent=1 // pred_fallthru
      _
    %p38 = scmp.eq.s32.totalorder 0, 0
    // Predicated region
    $region22: #{dnd_lstm_sequence.1} parent=1 // pred_check
      %p39 = pneg %p38
    $region23: #{dnd_lstm_sequence.1} parent=1 // pred_check_branch
      %41 = sbr.rel (%p39) target = $region25
    $region24: #{dnd_lstm_sequence.1} parent=1 // pred_region
      %p43 = scmp.lt.u32.totalorder 80, 8
      %p44 = pneg %p43
      // Predicated region
      $region26: #{dnd_lstm_sequence.1} parent=24 // pred_check
        _
      $region27: #{dnd_lstm_sequence.1} parent=24 // pred_check_branch
        %46 = sbr.rel (%p43) target = $region29
      $region28: #{dnd_lstm_sequence.1} parent=24 // pred_region
        %s62 = sand.u32 80, 7
        %p63 = scmp.eq.s32.totalorder %s62, 0
        // Predicated region
        $region41: #{dnd_lstm_sequence.1} parent=28 // pred_check
          %p64 = pneg %p63
        $region42: #{dnd_lstm_sequence.1} parent=28 // pred_check_branch
          %66 = sbr.rel (%p64) target = $region44
        $region43: #{dnd_lstm_sequence.1} parent=28 // pred_region
          loop: start=0, step=1, limit=1
          $region45: #{dnd_lstm_sequence.1} parent=43 // loop_pre_header
            _
          $region46: #{dnd_lstm_sequence.1} parent=43 // loop_header
            %s68 = sphi 0, %s72
            %p69 = scmp.ge.s32.totalorder %s68, 1
            %s73 = sphi %s5, %s5
            %s74 = sphi [#allocation2], [#allocation2]
          $region47: #{dnd_lstm_sequence.1} parent=43 // loop_header_branch
            %71 = sbr.rel (%p69) target = $region51
          $region48: #{dnd_lstm_sequence.1} parent=43 // loop_body
            %v75 = vld [vmem:[%s73] sm:$0xff]
            %76 = vst [vmem:[%s74] sm:$0xff] %v75
            %v77 = vld [vmem:[%s73 + $0x8] sm:$0xff]
            %78 = vst [vmem:[%s74 + $0x8] sm:$0xff] %v77
            %v79 = vld [vmem:[%s73 + $0x10] sm:$0xff]
            %80 = vst [vmem:[%s74 + $0x10] sm:$0xff] %v79
            %v81 = vld [vmem:[%s73 + $0x18] sm:$0xff]
            %82 = vst [vmem:[%s74 + $0x18] sm:$0xff] %v81
            %v83 = vld [vmem:[%s73 + $0x20] sm:$0xff]
            %84 = vst [vmem:[%s74 + $0x20] sm:$0xff] %v83
            %v85 = vld [vmem:[%s73 + $0x28] sm:$0xff]
            %86 = vst [vmem:[%s74 + $0x28] sm:$0xff] %v85
            %v87 = vld [vmem:[%s73 + $0x30] sm:$0xff]
            %88 = vst [vmem:[%s74 + $0x30] sm:$0xff] %v87
            %v89 = vld [vmem:[%s73 + $0x38] sm:$0xff]
            %90 = vst [vmem:[%s74 + $0x38] sm:$0xff] %v89
            %v91 = vld [vmem:[%s73 + $0x40] sm:$0xff]
            %92 = vst [vmem:[%s74 + $0x40] sm:$0xff] %v91
            %v93 = vld [vmem:[%s73 + $0x48] sm:$0xff]
            %94 = vst [vmem:[%s74 + $0x48] sm:$0xff] %v93
          $region49: #{dnd_lstm_sequence.1} parent=43 // loop_footer
            %s72 = sadd.s32 1, %s68
          $region50: #{dnd_lstm_sequence.1} parent=43 // loop_footer_branch
            %67 = sbr.rel target = $region46
          $region51: #{dnd_lstm_sequence.1} parent=43 // loop_exit
            _
        $region44: #{dnd_lstm_sequence.1} parent=28 // pred_fallthru
          _
        %p95 = pneg %p63
        // Predicated region
        $region52: #{dnd_lstm_sequence.1} parent=28 // pred_check
          _
        $region53: #{dnd_lstm_sequence.1} parent=28 // pred_check_branch
          %97 = sbr.rel (%p63) target = $region55
        $region54: #{dnd_lstm_sequence.1} parent=28 // pred_region
          %s98 = sand.u32 80, 7
        $region55: #{dnd_lstm_sequence.1} parent=28 // pred_fallthru
          _
      $region29: #{dnd_lstm_sequence.1} parent=24 // pred_fallthru
        _
      // Predicated region
      $region30: #{dnd_lstm_sequence.1} parent=24 // pred_check
        %p47 = pneg %p43
      $region31: #{dnd_lstm_sequence.1} parent=24 // pred_check_branch
        %49 = sbr.rel (%p47) target = $region33
      $region32: #{dnd_lstm_sequence.1} parent=24 // pred_region
        %s50 = sshll.u32 1, 80
        %s51 = ssub.s32 %s50, 1
        loop: start=0, step=1, limit=1
        $region34: #{dnd_lstm_sequence.1} parent=32 // loop_pre_header
          _
        $region35: #{dnd_lstm_sequence.1} parent=32 // loop_header
          %s53 = sphi 0, %s57
          %p54 = scmp.ge.s32.totalorder %s53, 1
          %s58 = sphi %s5, %s5
          %s59 = sphi [#allocation2], [#allocation2]
        $region36: #{dnd_lstm_sequence.1} parent=32 // loop_header_branch
          %56 = sbr.rel (%p54) target = $region40
        $region37: #{dnd_lstm_sequence.1} parent=32 // loop_body
          %v60 = vld [vmem:[%s58] sm:%s51]
          %61 = vst [vmem:[%s59] sm:%s51] %v60
        $region38: #{dnd_lstm_sequence.1} parent=32 // loop_footer
          %s57 = sadd.s32 1, %s53
        $region39: #{dnd_lstm_sequence.1} parent=32 // loop_footer_branch
          %52 = sbr.rel target = $region35
        $region40: #{dnd_lstm_sequence.1} parent=32 // loop_exit
          _
      $region33: #{dnd_lstm_sequence.1} parent=24 // pred_fallthru
        _
      // Predicated region
      $region56: #{dnd_lstm_sequence.1} parent=24 // pred_check
        _
      $region57: #{dnd_lstm_sequence.1} parent=24 // pred_check_branch
        %101 = sbr.rel (0) target = $region59
      $region58: #{dnd_lstm_sequence.1} parent=24 // pred_region
        %102 = vsyncadd [#allocation12], 1280
      $region59: #{dnd_lstm_sequence.1} parent=24 // pred_fallthru
        _
      %s103 = scalar_lea.sflag [#allocation12], 1
      // Predicated region
      $region60: #{dnd_lstm_sequence.1} parent=24 // pred_check
        _
      $region61: #{dnd_lstm_sequence.1} parent=24 // pred_check_branch
        %105 = sbr.rel target = $region63
      $region62: #{dnd_lstm_sequence.1} parent=24 // pred_region
        %106 = sst [smem:[#allocation23]] [#allocation22]
        %107 = sst [smem:[#allocation24]] [#allocation21]
      $region63: #{dnd_lstm_sequence.1} parent=24 // pred_fallthru
        _
      %109 = shalt.err (0)
      %s111 = sshll.u32 [#allocation3], 4
      %s112 = int_to_ptr.vmem [resolvable:$true] %s111
      %114 = dma.hbm_to_vmem [thread:$0]  %s6, 10240, %s112, %s103
      %s115 = scalar_lea.sflag [#allocation12], 2
      %p117 = scmp.lt.u32.totalorder 4, 8
      %p118 = pneg %p117
      // Predicated region
      $region64: #{dnd_lstm_sequence.1} parent=24 // pred_check
        _
      $region65: #{dnd_lstm_sequence.1} parent=24 // pred_check_branch
        %120 = sbr.rel (%p117) target = $region67
      $region66: #{dnd_lstm_sequence.1} parent=24 // pred_region
        %s136 = sand.u32 4, 7
        %p137 = scmp.eq.s32.totalorder %s136, 0
        %p138 = pneg %p137
        // Predicated region
        $region79: #{dnd_lstm_sequence.1} parent=66 // pred_check
          _
        $region80: #{dnd_lstm_sequence.1} parent=66 // pred_check_branch
          %140 = sbr.rel (%p137) target = $region82
        $region81: #{dnd_lstm_sequence.1} parent=66 // pred_region
          %s141 = sand.u32 4, 7
          %s142 = ssub.s32 4, %s141
          %s143 = scalar_lea.vmem %s7, %s142
          %s144 = ssub.s32 4, %s141
          %s145 = scalar_lea.vmem [#allocation8], %s144
          %s146 = sshll.u32 1, %s141
          %s147 = ssub.s32 %s146, 1
          loop: start=0, step=1, limit=1
          $region83: #{dnd_lstm_sequence.1} parent=81 // loop_pre_header
            _
          $region84: #{dnd_lstm_sequence.1} parent=81 // loop_header
            %s149 = sphi 0, %s153
            %p150 = scmp.ge.s32.totalorder %s149, 1
            %s154 = sphi %s143, %s143
            %s155 = sphi %s145, %s145
          $region85: #{dnd_lstm_sequence.1} parent=81 // loop_header_branch
            %152 = sbr.rel (%p150) target = $region89
          $region86: #{dnd_lstm_sequence.1} parent=81 // loop_body
            %v156 = vld [vmem:[%s154] sm:%s147]
            %157 = vst [vmem:[%s155] sm:%s147] %v156
          $region87: #{dnd_lstm_sequence.1} parent=81 // loop_footer
            %s153 = sadd.s32 1, %s149
          $region88: #{dnd_lstm_sequence.1} parent=81 // loop_footer_branch
            %148 = sbr.rel target = $region84
          $region89: #{dnd_lstm_sequence.1} parent=81 // loop_exit
            _
        $region82: #{dnd_lstm_sequence.1} parent=66 // pred_fallthru
          _
      $region67: #{dnd_lstm_sequence.1} parent=24 // pred_fallthru
        _
      // Predicated region
      $region68: #{dnd_lstm_sequence.1} parent=24 // pred_check
        %p121 = pneg %p117
      $region69: #{dnd_lstm_sequence.1} parent=24 // pred_check_branch
        %123 = sbr.rel (%p121) target = $region71
      $region70: #{dnd_lstm_sequence.1} parent=24 // pred_region
        %s124 = sshll.u32 1, 4
        %s125 = ssub.s32 %s124, 1
        loop: start=0, step=1, limit=1
        $region72: #{dnd_lstm_sequence.1} parent=70 // loop_pre_header
          _
        $region73: #{dnd_lstm_sequence.1} parent=70 // loop_header
          %s127 = sphi 0, %s131
          %p128 = scmp.ge.s32.totalorder %s127, 1
          %s132 = sphi %s7, %s7
          %s133 = sphi [#allocation8], [#allocation8]
        $region74: #{dnd_lstm_sequence.1} parent=70 // loop_header_branch
          %130 = sbr.rel (%p128) target = $region78
        $region75: #{dnd_lstm_sequence.1} parent=70 // loop_body
          %v134 = vld [vmem:[%s132] sm:%s125]
          %135 = vst [vmem:[%s133] sm:%s125] %v134
        $region76: #{dnd_lstm_sequence.1} parent=70 // loop_footer
          %s131 = sadd.s32 1, %s127
        $region77: #{dnd_lstm_sequence.1} parent=70 // loop_footer_branch
          %126 = sbr.rel target = $region73
        $region78: #{dnd_lstm_sequence.1} parent=70 // loop_exit
          _
      $region71: #{dnd_lstm_sequence.1} parent=24 // pred_fallthru
        _
      // Predicated region
      $region90: #{dnd_lstm_sequence.1} parent=24 // pred_check
        _
      $region91: #{dnd_lstm_sequence.1} parent=24 // pred_check_branch
        %160 = sbr.rel (0) target = $region93
      $region92: #{dnd_lstm_sequence.1} parent=24 // pred_region
        %161 = vsyncadd %s115, 64
      $region93: #{dnd_lstm_sequence.1} parent=24 // pred_fallthru
        _
      %s162 = scalar_lea.sflag [#allocation12], 3
      %p164 = scmp.lt.u32.totalorder 4, 8
      %p165 = pneg %p164
      // Predicated region
      $region94: #{dnd_lstm_sequence.1} parent=24 // pred_check
        _
      $region95: #{dnd_lstm_sequence.1} parent=24 // pred_check_branch
        %167 = sbr.rel (%p164) target = $region97
      $region96: #{dnd_lstm_sequence.1} parent=24 // pred_region
        %s183 = sand.u32 4, 7
        %p184 = scmp.eq.s32.totalorder %s183, 0
        %p185 = pneg %p184
        // Predicated region
        $region109: #{dnd_lstm_sequence.1} parent=96 // pred_check
          _
        $region110: #{dnd_lstm_sequence.1} parent=96 // pred_check_branch
          %187 = sbr.rel (%p184) target = $region112
        $region111: #{dnd_lstm_sequence.1} parent=96 // pred_region
          %s188 = sand.u32 4, 7
          %s189 = ssub.s32 4, %s188
          %s190 = scalar_lea.vmem %s8, %s189
          %s191 = ssub.s32 4, %s188
          %s192 = scalar_lea.vmem [#allocation9], %s191
          %s193 = sshll.u32 1, %s188
          %s194 = ssub.s32 %s193, 1
          loop: start=0, step=1, limit=1
          $region113: #{dnd_lstm_sequence.1} parent=111 // loop_pre_header
            _
          $region114: #{dnd_lstm_sequence.1} parent=111 // loop_header
            %s196 = sphi 0, %s200
            %p197 = scmp.ge.s32.totalorder %s196, 1
            %s201 = sphi %s190, %s190
            %s202 = sphi %s192, %s192
          $region115: #{dnd_lstm_sequence.1} parent=111 // loop_header_branch
            %199 = sbr.rel (%p197) target = $region119
          $region116: #{dnd_lstm_sequence.1} parent=111 // loop_body
            %v203 = vld [vmem:[%s201] sm:%s194]
            %204 = vst [vmem:[%s202] sm:%s194] %v203
          $region117: #{dnd_lstm_sequence.1} parent=111 // loop_footer
            %s200 = sadd.s32 1, %s196
          $region118: #{dnd_lstm_sequence.1} parent=111 // loop_footer_branch
            %195 = sbr.rel target = $region114
          $region119: #{dnd_lstm_sequence.1} parent=111 // loop_exit
            _
        $region112: #{dnd_lstm_sequence.1} parent=96 // pred_fallthru
          _
      $region97: #{dnd_lstm_sequence.1} parent=24 // pred_fallthru
        _
      // Predicated region
      $region98: #{dnd_lstm_sequence.1} parent=24 // pred_check
        %p168 = pneg %p164
      $region99: #{dnd_lstm_sequence.1} parent=24 // pred_check_branch
        %170 = sbr.rel (%p168) target = $region101
      $region100: #{dnd_lstm_sequence.1} parent=24 // pred_region
        %s171 = sshll.u32 1, 4
        %s172 = ssub.s32 %s171, 1
        loop: start=0, step=1, limit=1
        $region102: #{dnd_lstm_sequence.1} parent=100 // loop_pre_header
          _
        $region103: #{dnd_lstm_sequence.1} parent=100 // loop_header
          %s174 = sphi 0, %s178
          %p175 = scmp.ge.s32.totalorder %s174, 1
          %s179 = sphi %s8, %s8
          %s180 = sphi [#allocation9], [#allocation9]
        $region104: #{dnd_lstm_sequence.1} parent=100 // loop_header_branch
          %177 = sbr.rel (%p175) target = $region108
        $region105: #{dnd_lstm_sequence.1} parent=100 // loop_body
          %v181 = vld [vmem:[%s179] sm:%s172]
          %182 = vst [vmem:[%s180] sm:%s172] %v181
        $region106: #{dnd_lstm_sequence.1} parent=100 // loop_footer
          %s178 = sadd.s32 1, %s174
        $region107: #{dnd_lstm_sequence.1} parent=100 // loop_footer_branch
          %173 = sbr.rel target = $region103
        $region108: #{dnd_lstm_sequence.1} parent=100 // loop_exit
          _
      $region101: #{dnd_lstm_sequence.1} parent=24 // pred_fallthru
        _
      // Predicated region
      $region120: #{dnd_lstm_sequence.1} parent=24 // pred_check
        _
      $region121: #{dnd_lstm_sequence.1} parent=24 // pred_check_branch
        %207 = sbr.rel (0) target = $region123
      $region122: #{dnd_lstm_sequence.1} parent=24 // pred_region
        %208 = vsyncadd %s162, 64
      $region123: #{dnd_lstm_sequence.1} parent=24 // pred_fallthru
        _
      %s209 = scalar_lea.sflag [#allocation12], 4
      %p211 = scmp.lt.u32.totalorder 8, 8
      %p212 = pneg %p211
      // Predicated region
      $region124: #{dnd_lstm_sequence.1} parent=24 // pred_check
        _
      $region125: #{dnd_lstm_sequence.1} parent=24 // pred_check_branch
        %214 = sbr.rel (%p211) target = $region127
      $region126: #{dnd_lstm_sequence.1} parent=24 // pred_region
        %s230 = sand.u32 8, 7
        %p231 = scmp.eq.s32.totalorder %s230, 0
        // Predicated region
        $region139: #{dnd_lstm_sequence.1} parent=126 // pred_check
          %p232 = pneg %p231
        $region140: #{dnd_lstm_sequence.1} parent=126 // pred_check_branch
          %234 = sbr.rel (%p232) target = $region142
        $region141: #{dnd_lstm_sequence.1} parent=126 // pred_region
          loop: start=0, step=1, limit=1
          $region143: #{dnd_lstm_sequence.1} parent=141 // loop_pre_header
            _
          $region144: #{dnd_lstm_sequence.1} parent=141 // loop_header
            %s236 = sphi 0, %s240
            %p237 = scmp.ge.s32.totalorder %s236, 1
            %s241 = sphi %s9, %s9
            %s242 = sphi [#allocation4], [#allocation4]
          $region145: #{dnd_lstm_sequence.1} parent=141 // loop_header_branch
            %239 = sbr.rel (%p237) target = $region149
          $region146: #{dnd_lstm_sequence.1} parent=141 // loop_body
            %v243 = vld [vmem:[%s241] sm:$0xff]
            %244 = vst [vmem:[%s242] sm:$0xff] %v243
          $region147: #{dnd_lstm_sequence.1} parent=141 // loop_footer
            %s240 = sadd.s32 1, %s236
          $region148: #{dnd_lstm_sequence.1} parent=141 // loop_footer_branch
            %235 = sbr.rel target = $region144
          $region149: #{dnd_lstm_sequence.1} parent=141 // loop_exit
            _
        $region142: #{dnd_lstm_sequence.1} parent=126 // pred_fallthru
          _
        %p245 = pneg %p231
        // Predicated region
        $region150: #{dnd_lstm_sequence.1} parent=126 // pred_check
          _
        $region151: #{dnd_lstm_sequence.1} parent=126 // pred_check_branch
          %247 = sbr.rel (%p231) target = $region153
        $region152: #{dnd_lstm_sequence.1} parent=126 // pred_region
          %s248 = sand.u32 8, 7
        $region153: #{dnd_lstm_sequence.1} parent=126 // pred_fallthru
          _
      $region127: #{dnd_lstm_sequence.1} parent=24 // pred_fallthru
        _
      // Predicated region
      $region128: #{dnd_lstm_sequence.1} parent=24 // pred_check
        %p215 = pneg %p211
      $region129: #{dnd_lstm_sequence.1} parent=24 // pred_check_branch
        %217 = sbr.rel (%p215) target = $region131
      $region130: #{dnd_lstm_sequence.1} parent=24 // pred_region
        %s218 = sshll.u32 1, 8
        %s219 = ssub.s32 %s218, 1
        loop: start=0, step=1, limit=1
        $region132: #{dnd_lstm_sequence.1} parent=130 // loop_pre_header
          _
        $region133: #{dnd_lstm_sequence.1} parent=130 // loop_header
          %s221 = sphi 0, %s225
          %p222 = scmp.ge.s32.totalorder %s221, 1
          %s226 = sphi %s9, %s9
          %s227 = sphi [#allocation4], [#allocation4]
        $region134: #{dnd_lstm_sequence.1} parent=130 // loop_header_branch
          %224 = sbr.rel (%p222) target = $region138
        $region135: #{dnd_lstm_sequence.1} parent=130 // loop_body
          %v228 = vld [vmem:[%s226] sm:%s219]
          %229 = vst [vmem:[%s227] sm:%s219] %v228
        $region136: #{dnd_lstm_sequence.1} parent=130 // loop_footer
          %s225 = sadd.s32 1, %s221
        $region137: #{dnd_lstm_sequence.1} parent=130 // loop_footer_branch
          %220 = sbr.rel target = $region133
        $region138: #{dnd_lstm_sequence.1} parent=130 // loop_exit
          _
      $region131: #{dnd_lstm_sequence.1} parent=24 // pred_fallthru
        _
      // Predicated region
      $region154: #{dnd_lstm_sequence.1} parent=24 // pred_check
        _
      $region155: #{dnd_lstm_sequence.1} parent=24 // pred_check_branch
        %251 = sbr.rel (0) target = $region157
      $region156: #{dnd_lstm_sequence.1} parent=24 // pred_region
        %252 = vsyncadd %s209, 128
      $region157: #{dnd_lstm_sequence.1} parent=24 // pred_fallthru
        _
      %s253 = scalar_lea.sflag [#allocation12], 5
      %p255 = scmp.lt.u32.totalorder 8, 8
      %p256 = pneg %p255
      // Predicated region
      $region158: #{dnd_lstm_sequence.1} parent=24 // pred_check
        _
      $region159: #{dnd_lstm_sequence.1} parent=24 // pred_check_branch
        %258 = sbr.rel (%p255) target = $region161
      $region160: #{dnd_lstm_sequence.1} parent=24 // pred_region
        %s274 = sand.u32 8, 7
        %p275 = scmp.eq.s32.totalorder %s274, 0
        // Predicated region
        $region173: #{dnd_lstm_sequence.1} parent=160 // pred_check
          %p276 = pneg %p275
        $region174: #{dnd_lstm_sequence.1} parent=160 // pred_check_branch
          %278 = sbr.rel (%p276) target = $region176
        $region175: #{dnd_lstm_sequence.1} parent=160 // pred_region
          loop: start=0, step=1, limit=1
          $region177: #{dnd_lstm_sequence.1} parent=175 // loop_pre_header
            _
          $region178: #{dnd_lstm_sequence.1} parent=175 // loop_header
            %s280 = sphi 0, %s284
            %p281 = scmp.ge.s32.totalorder %s280, 1
            %s285 = sphi %s10, %s10
            %s286 = sphi [#allocation5], [#allocation5]
          $region179: #{dnd_lstm_sequence.1} parent=175 // loop_header_branch
            %283 = sbr.rel (%p281) target = $region183
          $region180: #{dnd_lstm_sequence.1} parent=175 // loop_body
            %v287 = vld [vmem:[%s285] sm:$0xff]
            %288 = vst [vmem:[%s286] sm:$0xff] %v287
          $region181: #{dnd_lstm_sequence.1} parent=175 // loop_footer
            %s284 = sadd.s32 1, %s280
          $region182: #{dnd_lstm_sequence.1} parent=175 // loop_footer_branch
            %279 = sbr.rel target = $region178
          $region183: #{dnd_lstm_sequence.1} parent=175 // loop_exit
            _
        $region176: #{dnd_lstm_sequence.1} parent=160 // pred_fallthru
          _
        %p289 = pneg %p275
        // Predicated region
        $region184: #{dnd_lstm_sequence.1} parent=160 // pred_check
          _
        $region185: #{dnd_lstm_sequence.1} parent=160 // pred_check_branch
          %291 = sbr.rel (%p275) target = $region187
        $region186: #{dnd_lstm_sequence.1} parent=160 // pred_region
          %s292 = sand.u32 8, 7
        $region187: #{dnd_lstm_sequence.1} parent=160 // pred_fallthru
          _
      $region161: #{dnd_lstm_sequence.1} parent=24 // pred_fallthru
        _
      // Predicated region
      $region162: #{dnd_lstm_sequence.1} parent=24 // pred_check
        %p259 = pneg %p255
      $region163: #{dnd_lstm_sequence.1} parent=24 // pred_check_branch
        %261 = sbr.rel (%p259) target = $region165
      $region164: #{dnd_lstm_sequence.1} parent=24 // pred_region
        %s262 = sshll.u32 1, 8
        %s263 = ssub.s32 %s262, 1
        loop: start=0, step=1, limit=1
        $region166: #{dnd_lstm_sequence.1} parent=164 // loop_pre_header
          _
        $region167: #{dnd_lstm_sequence.1} parent=164 // loop_header
          %s265 = sphi 0, %s269
          %p266 = scmp.ge.s32.totalorder %s265, 1
          %s270 = sphi %s10, %s10
          %s271 = sphi [#allocation5], [#allocation5]
        $region168: #{dnd_lstm_sequence.1} parent=164 // loop_header_branch
          %268 = sbr.rel (%p266) target = $region172
        $region169: #{dnd_lstm_sequence.1} parent=164 // loop_body
          %v272 = vld [vmem:[%s270] sm:%s263]
          %273 = vst [vmem:[%s271] sm:%s263] %v272
        $region170: #{dnd_lstm_sequence.1} parent=164 // loop_footer
          %s269 = sadd.s32 1, %s265
        $region171: #{dnd_lstm_sequence.1} parent=164 // loop_footer_branch
          %264 = sbr.rel target = $region167
        $region172: #{dnd_lstm_sequence.1} parent=164 // loop_exit
          _
      $region165: #{dnd_lstm_sequence.1} parent=24 // pred_fallthru
        _
      // Predicated region
      $region188: #{dnd_lstm_sequence.1} parent=24 // pred_check
        _
      $region189: #{dnd_lstm_sequence.1} parent=24 // pred_check_branch
        %295 = sbr.rel (0) target = $region191
      $region190: #{dnd_lstm_sequence.1} parent=24 // pred_region
        %296 = vsyncadd %s253, 128
      $region191: #{dnd_lstm_sequence.1} parent=24 // pred_fallthru
        _
      %s297 = scalar_lea.sflag [#allocation12], 6
      %p299 = scmp.lt.u32.totalorder 1, 8
      %p300 = pneg %p299
      // Predicated region
      $region192: #{dnd_lstm_sequence.1} parent=24 // pred_check
        _
      $region193: #{dnd_lstm_sequence.1} parent=24 // pred_check_branch
        %302 = sbr.rel (%p299) target = $region195
      $region194: #{dnd_lstm_sequence.1} parent=24 // pred_region
        %s318 = sand.u32 1, 7
        %p319 = scmp.eq.s32.totalorder %s318, 0
        %p320 = pneg %p319
        // Predicated region
        $region207: #{dnd_lstm_sequence.1} parent=194 // pred_check
          _
        $region208: #{dnd_lstm_sequence.1} parent=194 // pred_check_branch
          %322 = sbr.rel (%p319) target = $region210
        $region209: #{dnd_lstm_sequence.1} parent=194 // pred_region
          %s323 = sand.u32 1, 7
          %s324 = ssub.s32 1, %s323
          %s325 = scalar_lea.vmem %s11, %s324
          %s326 = ssub.s32 1, %s323
          %s327 = scalar_lea.vmem [#allocation6], %s326
          %s328 = sshll.u32 1, %s323
          %s329 = ssub.s32 %s328, 1
          loop: start=0, step=1, limit=1
          $region211: #{dnd_lstm_sequence.1} parent=209 // loop_pre_header
            _
          $region212: #{dnd_lstm_sequence.1} parent=209 // loop_header
            %s331 = sphi 0, %s335
            %p332 = scmp.ge.s32.totalorder %s331, 1
            %s336 = sphi %s325, %s325
            %s337 = sphi %s327, %s327
          $region213: #{dnd_lstm_sequence.1} parent=209 // loop_header_branch
            %334 = sbr.rel (%p332) target = $region217
          $region214: #{dnd_lstm_sequence.1} parent=209 // loop_body
            %v338 = vld [vmem:[%s336] sm:%s329]
            %339 = vst [vmem:[%s337] sm:%s329] %v338
          $region215: #{dnd_lstm_sequence.1} parent=209 // loop_footer
            %s335 = sadd.s32 1, %s331
          $region216: #{dnd_lstm_sequence.1} parent=209 // loop_footer_branch
            %330 = sbr.rel target = $region212
          $region217: #{dnd_lstm_sequence.1} parent=209 // loop_exit
            _
        $region210: #{dnd_lstm_sequence.1} parent=194 // pred_fallthru
          _
      $region195: #{dnd_lstm_sequence.1} parent=24 // pred_fallthru
        _
      // Predicated region
      $region196: #{dnd_lstm_sequence.1} parent=24 // pred_check
        %p303 = pneg %p299
      $region197: #{dnd_lstm_sequence.1} parent=24 // pred_check_branch
        %305 = sbr.rel (%p303) target = $region199
      $region198: #{dnd_lstm_sequence.1} parent=24 // pred_region
        %s306 = sshll.u32 1, 1
        %s307 = ssub.s32 %s306, 1
        loop: start=0, step=1, limit=1
        $region200: #{dnd_lstm_sequence.1} parent=198 // loop_pre_header
          _
        $region201: #{dnd_lstm_sequence.1} parent=198 // loop_header
          %s309 = sphi 0, %s313
          %p310 = scmp.ge.s32.totalorder %s309, 1
          %s314 = sphi %s11, %s11
          %s315 = sphi [#allocation6], [#allocation6]
        $region202: #{dnd_lstm_sequence.1} parent=198 // loop_header_branch
          %312 = sbr.rel (%p310) target = $region206
        $region203: #{dnd_lstm_sequence.1} parent=198 // loop_body
          %v316 = vld [vmem:[%s314] sm:%s307]
          %317 = vst [vmem:[%s315] sm:%s307] %v316
        $region204: #{dnd_lstm_sequence.1} parent=198 // loop_footer
          %s313 = sadd.s32 1, %s309
        $region205: #{dnd_lstm_sequence.1} parent=198 // loop_footer_branch
          %308 = sbr.rel target = $region201
        $region206: #{dnd_lstm_sequence.1} parent=198 // loop_exit
          _
      $region199: #{dnd_lstm_sequence.1} parent=24 // pred_fallthru
        _
      // Predicated region
      $region218: #{dnd_lstm_sequence.1} parent=24 // pred_check
        _
      $region219: #{dnd_lstm_sequence.1} parent=24 // pred_check_branch
        %342 = sbr.rel (0) target = $region221
      $region220: #{dnd_lstm_sequence.1} parent=24 // pred_region
        %343 = vsyncadd %s297, 16
      $region221: #{dnd_lstm_sequence.1} parent=24 // pred_fallthru
        _
      %s344 = scalar_lea.sflag [#allocation12], 7
      %p346 = scmp.lt.u32.totalorder 1, 8
      %p347 = pneg %p346
      // Predicated region
      $region222: #{dnd_lstm_sequence.1} parent=24 // pred_check
        _
      $region223: #{dnd_lstm_sequence.1} parent=24 // pred_check_branch
        %349 = sbr.rel (%p346) target = $region225
      $region224: #{dnd_lstm_sequence.1} parent=24 // pred_region
        %s365 = sand.u32 1, 7
        %p366 = scmp.eq.s32.totalorder %s365, 0
        %p367 = pneg %p366
        // Predicated region
        $region237: #{dnd_lstm_sequence.1} parent=224 // pred_check
          _
        $region238: #{dnd_lstm_sequence.1} parent=224 // pred_check_branch
          %369 = sbr.rel (%p366) target = $region240
        $region239: #{dnd_lstm_sequence.1} parent=224 // pred_region
          %s370 = sand.u32 1, 7
          %s371 = ssub.s32 1, %s370
          %s372 = scalar_lea.vmem %s12, %s371
          %s373 = ssub.s32 1, %s370
          %s374 = scalar_lea.vmem [#allocation7], %s373
          %s375 = sshll.u32 1, %s370
          %s376 = ssub.s32 %s375, 1
          loop: start=0, step=1, limit=1
          $region241: #{dnd_lstm_sequence.1} parent=239 // loop_pre_header
            _
          $region242: #{dnd_lstm_sequence.1} parent=239 // loop_header
            %s378 = sphi 0, %s382
            %p379 = scmp.ge.s32.totalorder %s378, 1
            %s383 = sphi %s372, %s372
            %s384 = sphi %s374, %s374
          $region243: #{dnd_lstm_sequence.1} parent=239 // loop_header_branch
            %381 = sbr.rel (%p379) target = $region247
          $region244: #{dnd_lstm_sequence.1} parent=239 // loop_body
            %v385 = vld [vmem:[%s383] sm:%s376]
            %386 = vst [vmem:[%s384] sm:%s376] %v385
          $region245: #{dnd_lstm_sequence.1} parent=239 // loop_footer
            %s382 = sadd.s32 1, %s378
          $region246: #{dnd_lstm_sequence.1} parent=239 // loop_footer_branch
            %377 = sbr.rel target = $region242
          $region247: #{dnd_lstm_sequence.1} parent=239 // loop_exit
            _
        $region240: #{dnd_lstm_sequence.1} parent=224 // pred_fallthru
          _
      $region225: #{dnd_lstm_sequence.1} parent=24 // pred_fallthru
        _
      // Predicated region
      $region226: #{dnd_lstm_sequence.1} parent=24 // pred_check
        %p350 = pneg %p346
      $region227: #{dnd_lstm_sequence.1} parent=24 // pred_check_branch
        %352 = sbr.rel (%p350) target = $region229
      $region228: #{dnd_lstm_sequence.1} parent=24 // pred_region
        %s353 = sshll.u32 1, 1
        %s354 = ssub.s32 %s353, 1
        loop: start=0, step=1, limit=1
        $region230: #{dnd_lstm_sequence.1} parent=228 // loop_pre_header
          _
        $region231: #{dnd_lstm_sequence.1} parent=228 // loop_header
          %s356 = sphi 0, %s360
          %p357 = scmp.ge.s32.totalorder %s356, 1
          %s361 = sphi %s12, %s12
          %s362 = sphi [#allocation7], [#allocation7]
        $region232: #{dnd_lstm_sequence.1} parent=228 // loop_header_branch
          %359 = sbr.rel (%p357) target = $region236
        $region233: #{dnd_lstm_sequence.1} parent=228 // loop_body
          %v363 = vld [vmem:[%s361] sm:%s354]
          %364 = vst [vmem:[%s362] sm:%s354] %v363
        $region234: #{dnd_lstm_sequence.1} parent=228 // loop_footer
          %s360 = sadd.s32 1, %s356
        $region235: #{dnd_lstm_sequence.1} parent=228 // loop_footer_branch
          %355 = sbr.rel target = $region231
        $region236: #{dnd_lstm_sequence.1} parent=228 // loop_exit
          _
      $region229: #{dnd_lstm_sequence.1} parent=24 // pred_fallthru
        _
      // Predicated region
      $region248: #{dnd_lstm_sequence.1} parent=24 // pred_check
        _
      $region249: #{dnd_lstm_sequence.1} parent=24 // pred_check_branch
        %389 = sbr.rel (0) target = $region251
      $region250: #{dnd_lstm_sequence.1} parent=24 // pred_region
        %390 = vsyncadd %s344, 16
      $region251: #{dnd_lstm_sequence.1} parent=24 // pred_fallthru
        _
      %s391 = smul.u32 8, 2
      %s392 = smul.u32 %s391, 5
      %s393 = sshll.u32 %s392, 4
      %394 = dma.done [#allocation12], %s393
      %s395 = smul.u32 8, 16
      %s396 = smul.u32 %s395, 5
      %s397 = sshll.u32 %s396, 4
      %398 = dma.done %s103, %s397
      %s399 = smul.u32 4, 1
      %s400 = sshll.u32 %s399, 4
      %401 = dma.done %s115, %s400
      %s402 = sshll.u32 %s399, 4
      %403 = dma.done %s162, %s402
      %s404 = smul.u32 8, 1
      %s405 = sshll.u32 %s404, 4
      %406 = dma.done %s209, %s405
      %s407 = sshll.u32 %s404, 4
      %408 = dma.done %s253, %s407
      %s409 = smul.u32 1, 1
      %s410 = sshll.u32 %s409, 4
      %411 = dma.done %s297, %s410
      %s412 = sshll.u32 %s409, 4
      %413 = dma.done %s344, %s412
      %s414 = sld [smem:[#allocation13]]
      %s415 = scalar_lea.smem [#allocation11], 0
      %416 = sst [smem:[%s415]] %s414
    $region25: #{dnd_lstm_sequence.1} parent=1 // pred_fallthru
      _
    %v417 = vld [vmem:[%s3] sm:$0xf]
    %v418 = vld [vmem:[#allocation2] sm:$0xff]
    %v419 = vld [vmem:[#allocation2 + $0x8] sm:$0xff]
    %v420 = vld [vmem:[#allocation2 + $0x10] sm:$0xff]
    %v421 = vld [vmem:[#allocation2 + $0x18] sm:$0xff]
    %v422 = vld [vmem:[#allocation2 + $0x20] sm:$0xff]
    %v423 = vld [vmem:[#allocation2 + $0x28] sm:$0xff]
    %v424 = vld [vmem:[#allocation2 + $0x30] sm:$0xff]
    %v425 = vld [vmem:[#allocation2 + $0x38] sm:$0xff]
    %v426 = vld [vmem:[#allocation2 + $0x40] sm:$0xff]
    %v427 = vld [vmem:[#allocation2 + $0x48] sm:$0xff]
    %v428 = vld [vmem:[%s4] sm:$0x1f]
    %v430 = vlaneseq
    %v431 = vshrl.u32 %v430, 7
    %v432 = vsub.s32 0, %v431
    %v433 = vrot.slane %v428, %v432
    %v434 = vlaneseq
    %v435 = vshrl.u32 %v434, 7
    %v436 = vsub.s32 1, %v435
    %v437 = vrot.slane %v428, %v436
    %v438 = vlaneseq
    %v439 = vshrl.u32 %v438, 7
    %v440 = vsub.s32 2, %v439
    %v441 = vrot.slane %v428, %v440
    %v442 = vlaneseq
    %v443 = vshrl.u32 %v442, 7
    %v444 = vsub.s32 3, %v443
    %v445 = vrot.slane %v428, %v444
    %v446 = vlaneseq
    %v447 = vshrl.u32 %v446, 7
    %v448 = vsub.s32 4, %v447
    %v449 = vrot.slane %v428, %v448
    %vm455 = vcmask 130048
    %v457 = vsel %vm455, %v417, 0
    %459 = vmatprep.subr.mxu0 0.0
    %460 = vmatpush1.msra.mxu0 0.0
    %461 = vmatprep.subr.mxu0 0.0
    %462 = vmatpush1.msra.mxu0 0.0
    %463 = vmatprep.subr.mxu0 0.0
    %464 = vmatpush1.msra.mxu0 0.0
    %465 = vmatprep.subr.mxu0 0.0
    %466 = vmatpush1.msra.mxu0 0.0
    %467 = vmatprep.subr.mxu0 0.0
    %468 = vmatpush1.msra.mxu0 0.0
    %469 = vmatprep.subr.mxu0 0.0
    %470 = vmatpush1.msra.mxu0 0.0
    %471 = vmatprep.subr.mxu0 0.0
    %472 = vmatpush1.msra.mxu0 0.0
    %473 = vmatprep.subr.mxu0 0.0
    %474 = vmatpush1.msra.mxu0 0.0
    %475 = vmatprep.subr.mxu0 0.0
    %476 = vmatpush1.msra.mxu0 0.0
    %477 = vmatprep.subr.mxu0 0.0
    %478 = vmatpush1.msra.mxu0 0.0
    %479 = vmatprep.subr.mxu0 0.0
    %480 = vmatpush1.msra.mxu0 0.0
    %481 = vmatprep.subr.mxu0 0.0
    %482 = vmatpush1.msra.mxu0 0.0
    %483 = vmatprep.subr.mxu0 0.0
    %484 = vmatpush1.msra.mxu0 0.0
    %485 = vmatprep.subr.mxu0 0.0
    %486 = vmatpush1.msra.mxu0 0.0
    %487 = vmatprep.subr.mxu0 %v424
    %488 = vmatpush1.msra.mxu0 %v423
    %489 = vmatprep.subr.mxu0 %v419
    %490 = vmatpush1.msra.mxu0 %v418
    %491 = vmatprep.subr.mxu0 0.0
    %492 = vmatpush2.msra.mxu0 0.0
    %493 = vmatprep.subr.mxu0 0.0
    %494 = vmatpush2.msra.mxu0 0.0
    %495 = vmatprep.subr.mxu0 0.0
    %496 = vmatpush2.msra.mxu0 0.0
    %497 = vmatprep.subr.mxu0 0.0
    %498 = vmatpush2.msra.mxu0 0.0
    %499 = vmatprep.subr.mxu0 0.0
    %500 = vmatpush2.msra.mxu0 0.0
    %501 = vmatprep.subr.mxu0 0.0
    %502 = vmatpush2.msra.mxu0 0.0
    %503 = vmatprep.subr.mxu0 0.0
    %504 = vmatpush2.msra.mxu0 0.0
    %505 = vmatprep.subr.mxu0 0.0
    %506 = vmatpush2.msra.mxu0 0.0
    %507 = vmatprep.subr.mxu0 0.0
    %508 = vmatpush2.msra.mxu0 0.0
    %509 = vmatprep.subr.mxu0 0.0
    %510 = vmatpush2.msra.mxu0 0.0
    %511 = vmatprep.subr.mxu0 0.0
    %512 = vmatpush2.msra.mxu0 0.0
    %513 = vmatprep.subr.mxu0 0.0
    %514 = vmatpush2.msra.mxu0 0.0
    %515 = vmatprep.subr.mxu0 0.0
    %516 = vmatpush2.msra.mxu0 0.0
    %517 = vmatprep.subr.mxu0 0.0
    %518 = vmatpush2.msra.mxu0 0.0
    %519 = vmatprep.subr.mxu0 0.0
    %520 = vmatpush2.msra.mxu0 0.0
    %521 = vmatprep.subr.mxu0 0.0
    %522 = vmatpush2.msra.mxu0 0.0
    %523 = vmatprep.mubr.f32.mxu0 0.0
    %524 = vmatmul.mubr.f32.gmra.mxu0 %v457
    %v525 = vpop.f32.mrf.mxu0
    %v526 = vadd.f32 %v433, %v525
    %v527 = vpop.f32.mrf.mxu0
    %v528 = vadd.f32 %v437, %v527
    %529 = vdwg.mxu0
    %530 = vmatprep.subr.mxu0 0.0
    %531 = vmatpush1.msra.mxu0 0.0
    %532 = vmatprep.subr.mxu0 0.0
    %533 = vmatpush1.msra.mxu0 0.0
    %534 = vmatprep.subr.mxu0 0.0
    %535 = vmatpush1.msra.mxu0 0.0
    %536 = vmatprep.subr.mxu0 0.0
    %537 = vmatpush1.msra.mxu0 0.0
    %538 = vmatprep.subr.mxu0 0.0
    %539 = vmatpush1.msra.mxu0 0.0
    %540 = vmatprep.subr.mxu0 0.0
    %541 = vmatpush1.msra.mxu0 0.0
    %542 = vmatprep.subr.mxu0 0.0
    %543 = vmatpush1.msra.mxu0 0.0
    %544 = vmatprep.subr.mxu0 0.0
    %545 = vmatpush1.msra.mxu0 0.0
    %546 = vmatprep.subr.mxu0 0.0
    %547 = vmatpush1.msra.mxu0 0.0
    %548 = vmatprep.subr.mxu0 0.0
    %549 = vmatpush1.msra.mxu0 0.0
    %550 = vmatprep.subr.mxu0 0.0
    %551 = vmatpush1.msra.mxu0 0.0
    %552 = vmatprep.subr.mxu0 0.0
    %553 = vmatpush1.msra.mxu0 0.0
    %554 = vmatprep.subr.mxu0 0.0
    %555 = vmatpush1.msra.mxu0 0.0
    %556 = vmatprep.subr.mxu0 0.0
    %557 = vmatpush1.msra.mxu0 0.0
    %558 = vmatprep.subr.mxu0 %v426
    %559 = vmatpush1.msra.mxu0 %v425
    %560 = vmatprep.subr.mxu0 %v421
    %561 = vmatpush1.msra.mxu0 %v420
    %562 = vmatprep.subr.mxu0 0.0
    %563 = vmatpush2.msra.mxu0 0.0
    %564 = vmatprep.subr.mxu0 0.0
    %565 = vmatpush2.msra.mxu0 0.0
    %566 = vmatprep.subr.mxu0 0.0
    %567 = vmatpush2.msra.mxu0 0.0
    %568 = vmatprep.subr.mxu0 0.0
    %569 = vmatpush2.msra.mxu0 0.0
    %570 = vmatprep.subr.mxu0 0.0
    %571 = vmatpush2.msra.mxu0 0.0
    %572 = vmatprep.subr.mxu0 0.0
    %573 = vmatpush2.msra.mxu0 0.0
    %574 = vmatprep.subr.mxu0 0.0
    %575 = vmatpush2.msra.mxu0 0.0
    %576 = vmatprep.subr.mxu0 0.0
    %577 = vmatpush2.msra.mxu0 0.0
    %578 = vmatprep.subr.mxu0 0.0
    %579 = vmatpush2.msra.mxu0 0.0
    %580 = vmatprep.subr.mxu0 0.0
    %581 = vmatpush2.msra.mxu0 0.0
    %582 = vmatprep.subr.mxu0 0.0
    %583 = vmatpush2.msra.mxu0 0.0
    %584 = vmatprep.subr.mxu0 0.0
    %585 = vmatpush2.msra.mxu0 0.0
    %586 = vmatprep.subr.mxu0 0.0
    %587 = vmatpush2.msra.mxu0 0.0
    %588 = vmatprep.subr.mxu0 0.0
    %589 = vmatpush2.msra.mxu0 0.0
    %590 = vmatprep.subr.mxu0 0.0
    %591 = vmatpush2.msra.mxu0 0.0
    %592 = vmatprep.subr.mxu0 0.0
    %593 = vmatpush2.msra.mxu0 0.0
    %594 = vmatprep.mubr.f32.mxu0 0.0
    %595 = vmatmul.mubr.f32.gmra.mxu0 %v457
    %v596 = vpop.f32.mrf.mxu0
    %v597 = vadd.f32 %v441, %v596
    %v598 = vpop.f32.mrf.mxu0
    %v599 = vadd.f32 %v445, %v598
    %600 = vdwg.mxu0
    %601 = vmatprep.subr.mxu0 0.0
    %602 = vmatpush1.msra.mxu0 0.0
    %603 = vmatprep.subr.mxu0 0.0
    %604 = vmatpush1.msra.mxu0 0.0
    %605 = vmatprep.subr.mxu0 0.0
    %606 = vmatpush1.msra.mxu0 0.0
    %607 = vmatprep.subr.mxu0 0.0
    %608 = vmatpush1.msra.mxu0 0.0
    %609 = vmatprep.subr.mxu0 0.0
    %610 = vmatpush1.msra.mxu0 0.0
    %611 = vmatprep.subr.mxu0 0.0
    %612 = vmatpush1.msra.mxu0 0.0
    %613 = vmatprep.subr.mxu0 0.0
    %614 = vmatpush1.msra.mxu0 0.0
    %615 = vmatprep.subr.mxu0 0.0
    %616 = vmatpush1.msra.mxu0 0.0
    %617 = vmatprep.subr.mxu0 0.0
    %618 = vmatpush1.msra.mxu0 0.0
    %619 = vmatprep.subr.mxu0 0.0
    %620 = vmatpush1.msra.mxu0 0.0
    %621 = vmatprep.subr.mxu0 0.0
    %622 = vmatpush1.msra.mxu0 0.0
    %623 = vmatprep.subr.mxu0 0.0
    %624 = vmatpush1.msra.mxu0 0.0
    %625 = vmatprep.subr.mxu0 0.0
    %626 = vmatpush1.msra.mxu0 0.0
    %627 = vmatprep.subr.mxu0 0.0
    %628 = vmatpush1.msra.mxu0 0.0
    %629 = vmatprep.subr.mxu0 0.0
    %630 = vmatpush1.msra.mxu0 %v427
    %631 = vmatprep.subr.mxu0 0.0
    %632 = vmatpush1.msra.mxu0 %v422
    %633 = vmatprep.subr.mxu0 0.0
    %634 = vmatpush2.msra.mxu0 0.0
    %635 = vmatprep.subr.mxu0 0.0
    %636 = vmatpush2.msra.mxu0 0.0
    %637 = vmatprep.subr.mxu0 0.0
    %638 = vmatpush2.msra.mxu0 0.0
    %639 = vmatprep.subr.mxu0 0.0
    %640 = vmatpush2.msra.mxu0 0.0
    %641 = vmatprep.subr.mxu0 0.0
    %642 = vmatpush2.msra.mxu0 0.0
    %643 = vmatprep.subr.mxu0 0.0
    %644 = vmatpush2.msra.mxu0 0.0
    %645 = vmatprep.subr.mxu0 0.0
    %646 = vmatpush2.msra.mxu0 0.0
    %647 = vmatprep.subr.mxu0 0.0
    %648 = vmatpush2.msra.mxu0 0.0
    %649 = vmatprep.subr.mxu0 0.0
    %650 = vmatpush2.msra.mxu0 0.0
    %651 = vmatprep.subr.mxu0 0.0
    %652 = vmatpush2.msra.mxu0 0.0
    %653 = vmatprep.subr.mxu0 0.0
    %654 = vmatpush2.msra.mxu0 0.0
    %655 = vmatprep.subr.mxu0 0.0
    %656 = vmatpush2.msra.mxu0 0.0
    %657 = vmatprep.subr.mxu0 0.0
    %658 = vmatpush2.msra.mxu0 0.0
    %659 = vmatprep.subr.mxu0 0.0
    %660 = vmatpush2.msra.mxu0 0.0
    %661 = vmatprep.subr.mxu0 0.0
    %662 = vmatpush2.msra.mxu0 0.0
    %663 = vmatprep.subr.mxu0 0.0
    %664 = vmatpush2.msra.mxu0 0.0
    %665 = vmatprep.mubr.f32.mxu0 0.0
    %666 = vmatmul.mubr.f32.gmra.mxu0 %v457
    %v667 = vpop.f32.mrf.mxu0
    %v668 = vadd.f32 %v449, %v667
    %v669 = vpop.f32.mrf.mxu0
    %670 = vdwg.mxu0
    %v675 = vcombine.low %v526, %v528
    %v676 = vcombine.low %v597, %v599
    %679 = vst [vmem:[#allocation10] sm:$0xff] %v675
    %680 = vst [vmem:[#allocation10 + $0x8] sm:$0xff] %v676
    %681 = vst [vmem:[#allocation10 + $0x10] sm:$0xf] %v668
    %v682 = vld [vmem:[#allocation3] sm:$0xff]
    %v683 = vld [vmem:[#allocation3 + $0x8] sm:$0xff]
    %v684 = vld [vmem:[#allocation3 + $0x10] sm:$0xff]
    %v685 = vld [vmem:[#allocation3 + $0x18] sm:$0xff]
    %v686 = vld [vmem:[#allocation3 + $0x20] sm:$0xff]
    %v687 = vld [vmem:[#allocation3 + $0x28] sm:$0xff]
    %v688 = vld [vmem:[#allocation3 + $0x30] sm:$0xff]
    %v689 = vld [vmem:[#allocation3 + $0x38] sm:$0xff]
    %v690 = vld [vmem:[#allocation3 + $0x40] sm:$0xff]
    %v691 = vld [vmem:[#allocation3 + $0x48] sm:$0xff]
    %v692 = vld [vmem:[#allocation3 + $0x50] sm:$0xff]
    %v693 = vld [vmem:[#allocation3 + $0x58] sm:$0xff]
    %v694 = vld [vmem:[#allocation3 + $0x60] sm:$0xff]
    %v695 = vld [vmem:[#allocation3 + $0x68] sm:$0xff]
    %v696 = vld [vmem:[#allocation3 + $0x70] sm:$0xff]
    %v697 = vld [vmem:[#allocation3 + $0x78] sm:$0xff]
    %v698 = vld [vmem:[#allocation3 + $0x80] sm:$0xff]
    %v699 = vld [vmem:[#allocation3 + $0x88] sm:$0xff]
    %v700 = vld [vmem:[#allocation3 + $0x90] sm:$0xff]
    %v701 = vld [vmem:[#allocation3 + $0x98] sm:$0xff]
    %v702 = vld [vmem:[#allocation3 + $0xa0] sm:$0xff]
    %v703 = vld [vmem:[#allocation3 + $0xa8] sm:$0xff]
    %v704 = vld [vmem:[#allocation3 + $0xb0] sm:$0xff]
    %v705 = vld [vmem:[#allocation3 + $0xb8] sm:$0xff]
    %v706 = vld [vmem:[#allocation3 + $0xc0] sm:$0xff]
    %v707 = vld [vmem:[#allocation3 + $0xc8] sm:$0xff]
    %v708 = vld [vmem:[#allocation3 + $0xd0] sm:$0xff]
    %v709 = vld [vmem:[#allocation3 + $0xd8] sm:$0xff]
    %v710 = vld [vmem:[#allocation3 + $0xe0] sm:$0xff]
    %v711 = vld [vmem:[#allocation3 + $0xe8] sm:$0xff]
    %v712 = vld [vmem:[#allocation3 + $0xf0] sm:$0xff]
    %v713 = vld [vmem:[#allocation3 + $0xf8] sm:$0xff]
    %v714 = vld [vmem:[#allocation3 + $0x100] sm:$0xff]
    %v715 = vld [vmem:[#allocation3 + $0x108] sm:$0xff]
    %v716 = vld [vmem:[#allocation3 + $0x110] sm:$0xff]
    %v717 = vld [vmem:[#allocation3 + $0x118] sm:$0xff]
    %v718 = vld [vmem:[#allocation3 + $0x120] sm:$0xff]
    %v719 = vld [vmem:[#allocation3 + $0x128] sm:$0xff]
    %v720 = vld [vmem:[#allocation3 + $0x130] sm:$0xff]
    %v721 = vld [vmem:[#allocation3 + $0x138] sm:$0xff]
    %v722 = vld [vmem:[#allocation3 + $0x140] sm:$0xff]
    %v723 = vld [vmem:[#allocation3 + $0x148] sm:$0xff]
    %v724 = vld [vmem:[#allocation3 + $0x150] sm:$0xff]
    %v725 = vld [vmem:[#allocation3 + $0x158] sm:$0xff]
    %v726 = vld [vmem:[#allocation3 + $0x160] sm:$0xff]
    %v727 = vld [vmem:[#allocation3 + $0x168] sm:$0xff]
    %v728 = vld [vmem:[#allocation3 + $0x170] sm:$0xff]
    %v729 = vld [vmem:[#allocation3 + $0x178] sm:$0xff]
    %v730 = vld [vmem:[#allocation3 + $0x180] sm:$0xff]
    %v731 = vld [vmem:[#allocation3 + $0x188] sm:$0xff]
    %v732 = vld [vmem:[#allocation3 + $0x190] sm:$0xff]
    %v733 = vld [vmem:[#allocation3 + $0x198] sm:$0xff]
    %v734 = vld [vmem:[#allocation3 + $0x1a0] sm:$0xff]
    %v735 = vld [vmem:[#allocation3 + $0x1a8] sm:$0xff]
    %v736 = vld [vmem:[#allocation3 + $0x1b0] sm:$0xff]
    %v737 = vld [vmem:[#allocation3 + $0x1b8] sm:$0xff]
    %v738 = vld [vmem:[#allocation3 + $0x1c0] sm:$0xff]
    %v739 = vld [vmem:[#allocation3 + $0x1c8] sm:$0xff]
    %v740 = vld [vmem:[#allocation3 + $0x1d0] sm:$0xff]
    %v741 = vld [vmem:[#allocation3 + $0x1d8] sm:$0xff]
    %v742 = vld [vmem:[#allocation3 + $0x1e0] sm:$0xff]
    %v743 = vld [vmem:[#allocation3 + $0x1e8] sm:$0xff]
    %v744 = vld [vmem:[#allocation3 + $0x1f0] sm:$0xff]
    %v745 = vld [vmem:[#allocation3 + $0x1f8] sm:$0xff]
    %v746 = vld [vmem:[#allocation3 + $0x200] sm:$0xff]
    %v747 = vld [vmem:[#allocation3 + $0x208] sm:$0xff]
    %v748 = vld [vmem:[#allocation3 + $0x210] sm:$0xff]
    %v749 = vld [vmem:[#allocation3 + $0x218] sm:$0xff]
    %v750 = vld [vmem:[#allocation3 + $0x220] sm:$0xff]
    %v751 = vld [vmem:[#allocation3 + $0x228] sm:$0xff]
    %v752 = vld [vmem:[#allocation3 + $0x230] sm:$0xff]
    %v753 = vld [vmem:[#allocation3 + $0x238] sm:$0xff]
    %v754 = vld [vmem:[#allocation3 + $0x240] sm:$0xff]
    %v755 = vld [vmem:[#allocation3 + $0x248] sm:$0xff]
    %v756 = vld [vmem:[#allocation3 + $0x250] sm:$0xff]
    %v757 = vld [vmem:[#allocation3 + $0x258] sm:$0xff]
    %v758 = vld [vmem:[#allocation3 + $0x260] sm:$0xff]
    %v759 = vld [vmem:[#allocation3 + $0x268] sm:$0xff]
    %v760 = vld [vmem:[#allocation3 + $0x270] sm:$0xff]
    %v761 = vld [vmem:[#allocation3 + $0x278] sm:$0xff]
    %s762 = sld [smem:[#allocation15]]
    %s763 = sld [smem:[#allocation14]]
    %v764 = vld [vmem:[#allocation8] sm:$0xf]
    %v765 = vld [vmem:[#allocation9] sm:$0xf]
    %s766 = sld [smem:[#allocation11]]
    %p767 = scmp.lt.s32.totalorder 0, %s762
    %v768 = vld [vmem:[%s3] sm:$0xf]
    %v769 = vld [vmem:[#allocation10] sm:$0xff]
    %v770 = vld [vmem:[#allocation10 + $0x8] sm:$0xff]
    %v771 = vld [vmem:[#allocation10 + $0x10] sm:$0xf]
    %772 = vmatprep.subr.mxu0 %v758
    %773 = vmatpush1.msra.mxu0 %v757
    %774 = vmatprep.subr.mxu0 %v753
    %775 = vmatpush1.msra.mxu0 %v752
    %776 = vmatprep.subr.mxu0 %v748
    %777 = vmatpush1.msra.mxu0 %v747
    %778 = vmatprep.subr.mxu0 %v743
    %779 = vmatpush1.msra.mxu0 %v742
    %780 = vmatprep.subr.mxu0 %v738
    %781 = vmatpush1.msra.mxu0 %v737
    %782 = vmatprep.subr.mxu0 %v733
    %783 = vmatpush1.msra.mxu0 %v732
    %784 = vmatprep.subr.mxu0 %v728
    %785 = vmatpush1.msra.mxu0 %v727
    %786 = vmatprep.subr.mxu0 %v723
    %787 = vmatpush1.msra.mxu0 %v722
    %788 = vmatprep.subr.mxu0 %v718
    %789 = vmatpush1.msra.mxu0 %v717
    %790 = vmatprep.subr.mxu0 %v713
    %791 = vmatpush1.msra.mxu0 %v712
    %792 = vmatprep.subr.mxu0 %v708
    %793 = vmatpush1.msra.mxu0 %v707
    %794 = vmatprep.subr.mxu0 %v703
    %795 = vmatpush1.msra.mxu0 %v702
    %796 = vmatprep.subr.mxu0 %v698
    %797 = vmatpush1.msra.mxu0 %v697
    %798 = vmatprep.subr.mxu0 %v693
    %799 = vmatpush1.msra.mxu0 %v692
    %800 = vmatprep.subr.mxu0 %v688
    %801 = vmatpush1.msra.mxu0 %v687
    %802 = vmatprep.subr.mxu0 %v683
    %803 = vmatpush1.msra.mxu0 %v682
    %804 = vmatprep.subr.mxu0 0.0
    %805 = vmatpush2.msra.mxu0 0.0
    %806 = vmatprep.subr.mxu0 0.0
    %807 = vmatpush2.msra.mxu0 0.0
    %808 = vmatprep.subr.mxu0 0.0
    %809 = vmatpush2.msra.mxu0 0.0
    %810 = vmatprep.subr.mxu0 0.0
    %811 = vmatpush2.msra.mxu0 0.0
    %812 = vmatprep.subr.mxu0 0.0
    %813 = vmatpush2.msra.mxu0 0.0
    %814 = vmatprep.subr.mxu0 0.0
    %815 = vmatpush2.msra.mxu0 0.0
    %816 = vmatprep.subr.mxu0 0.0
    %817 = vmatpush2.msra.mxu0 0.0
    %818 = vmatprep.subr.mxu0 0.0
    %819 = vmatpush2.msra.mxu0 0.0
    %820 = vmatprep.subr.mxu0 0.0
    %821 = vmatpush2.msra.mxu0 0.0
    %822 = vmatprep.subr.mxu0 0.0
    %823 = vmatpush2.msra.mxu0 0.0
    %824 = vmatprep.subr.mxu0 0.0
    %825 = vmatpush2.msra.mxu0 0.0
    %826 = vmatprep.subr.mxu0 0.0
    %827 = vmatpush2.msra.mxu0 0.0
    %828 = vmatprep.subr.mxu0 0.0
    %829 = vmatpush2.msra.mxu0 0.0
    %830 = vmatprep.subr.mxu0 0.0
    %831 = vmatpush2.msra.mxu0 0.0
    %832 = vmatprep.subr.mxu0 0.0
    %833 = vmatpush2.msra.mxu0 0.0
    %834 = vmatprep.subr.mxu0 0.0
    %835 = vmatpush2.msra.mxu0 0.0
    %836 = vmatprep.mubr.f32.mxu0 0.0
    %837 = vmatmul.mubr.f32.gmra.mxu0 %v764
    %v838 = vpop.f32.mrf.mxu0
    %v839 = vadd.f32 0.0, %v838
    %v840 = vpop.f32.mrf.mxu0
    %v841 = vadd.f32 0.0, %v840
    %842 = vdwg.mxu0
    %843 = vmatprep.subr.mxu0 %v760
    %844 = vmatpush1.msra.mxu0 %v759
    %845 = vmatprep.subr.mxu0 %v755
    %846 = vmatpush1.msra.mxu0 %v754
    %847 = vmatprep.subr.mxu0 %v750
    %848 = vmatpush1.msra.mxu0 %v749
    %849 = vmatprep.subr.mxu0 %v745
    %850 = vmatpush1.msra.mxu0 %v744
    %851 = vmatprep.subr.mxu0 %v740
    %852 = vmatpush1.msra.mxu0 %v739
    %853 = vmatprep.subr.mxu0 %v735
    %854 = vmatpush1.msra.mxu0 %v734
    %855 = vmatprep.subr.mxu0 %v730
    %856 = vmatpush1.msra.mxu0 %v729
    %857 = vmatprep.subr.mxu0 %v725
    %858 = vmatpush1.msra.mxu0 %v724
    %859 = vmatprep.subr.mxu0 %v720
    %860 = vmatpush1.msra.mxu0 %v719
    %861 = vmatprep.subr.mxu0 %v715
    %862 = vmatpush1.msra.mxu0 %v714
    %863 = vmatprep.subr.mxu0 %v710
    %864 = vmatpush1.msra.mxu0 %v709
    %865 = vmatprep.subr.mxu0 %v705
    %866 = vmatpush1.msra.mxu0 %v704
    %867 = vmatprep.subr.mxu0 %v700
    %868 = vmatpush1.msra.mxu0 %v699
    %869 = vmatprep.subr.mxu0 %v695
    %870 = vmatpush1.msra.mxu0 %v694
    %871 = vmatprep.subr.mxu0 %v690
    %872 = vmatpush1.msra.mxu0 %v689
    %873 = vmatprep.subr.mxu0 %v685
    %874 = vmatpush1.msra.mxu0 %v684
    %875 = vmatprep.subr.mxu0 0.0
    %876 = vmatpush2.msra.mxu0 0.0
    %877 = vmatprep.subr.mxu0 0.0
    %878 = vmatpush2.msra.mxu0 0.0
    %879 = vmatprep.subr.mxu0 0.0
    %880 = vmatpush2.msra.mxu0 0.0
    %881 = vmatprep.subr.mxu0 0.0
    %882 = vmatpush2.msra.mxu0 0.0
    %883 = vmatprep.subr.mxu0 0.0
    %884 = vmatpush2.msra.mxu0 0.0
    %885 = vmatprep.subr.mxu0 0.0
    %886 = vmatpush2.msra.mxu0 0.0
    %887 = vmatprep.subr.mxu0 0.0
    %888 = vmatpush2.msra.mxu0 0.0
    %889 = vmatprep.subr.mxu0 0.0
    %890 = vmatpush2.msra.mxu0 0.0
    %891 = vmatprep.subr.mxu0 0.0
    %892 = vmatpush2.msra.mxu0 0.0
    %893 = vmatprep.subr.mxu0 0.0
    %894 = vmatpush2.msra.mxu0 0.0
    %895 = vmatprep.subr.mxu0 0.0
    %896 = vmatpush2.msra.mxu0 0.0
    %897 = vmatprep.subr.mxu0 0.0
    %898 = vmatpush2.msra.mxu0 0.0
    %899 = vmatprep.subr.mxu0 0.0
    %900 = vmatpush2.msra.mxu0 0.0
    %901 = vmatprep.subr.mxu0 0.0
    %902 = vmatpush2.msra.mxu0 0.0
    %903 = vmatprep.subr.mxu0 0.0
    %904 = vmatpush2.msra.mxu0 0.0
    %905 = vmatprep.subr.mxu0 0.0
    %906 = vmatpush2.msra.mxu0 0.0
    %907 = vmatprep.mubr.f32.mxu0 0.0
    %908 = vmatmul.mubr.f32.gmra.mxu0 %v764
    %v909 = vpop.f32.mrf.mxu0
    %v910 = vadd.f32 0.0, %v909
    %v911 = vpop.f32.mrf.mxu0
    %v912 = vadd.f32 0.0, %v911
    %913 = vdwg.mxu0
    %914 = vmatprep.subr.mxu0 0.0
    %915 = vmatpush1.msra.mxu0 %v761
    %916 = vmatprep.subr.mxu0 0.0
    %917 = vmatpush1.msra.mxu0 %v756
    %918 = vmatprep.subr.mxu0 0.0
    %919 = vmatpush1.msra.mxu0 %v751
    %920 = vmatprep.subr.mxu0 0.0
    %921 = vmatpush1.msra.mxu0 %v746
    %922 = vmatprep.subr.mxu0 0.0
    %923 = vmatpush1.msra.mxu0 %v741
    %924 = vmatprep.subr.mxu0 0.0
    %925 = vmatpush1.msra.mxu0 %v736
    %926 = vmatprep.subr.mxu0 0.0
    %927 = vmatpush1.msra.mxu0 %v731
    %928 = vmatprep.subr.mxu0 0.0
    %929 = vmatpush1.msra.mxu0 %v726
    %930 = vmatprep.subr.mxu0 0.0
    %931 = vmatpush1.msra.mxu0 %v721
    %932 = vmatprep.subr.mxu0 0.0
    %933 = vmatpush1.msra.mxu0 %v716
    %934 = vmatprep.subr.mxu0 0.0
    %935 = vmatpush1.msra.mxu0 %v711
    %936 = vmatprep.subr.mxu0 0.0
    %937 = vmatpush1.msra.mxu0 %v706
    %938 = vmatprep.subr.mxu0 0.0
    %939 = vmatpush1.msra.mxu0 %v701
    %940 = vmatprep.subr.mxu0 0.0
    %941 = vmatpush1.msra.mxu0 %v696
    %942 = vmatprep.subr.mxu0 0.0
    %943 = vmatpush1.msra.mxu0 %v691
    %944 = vmatprep.subr.mxu0 0.0
    %945 = vmatpush1.msra.mxu0 %v686
    %946 = vmatprep.subr.mxu0 0.0
    %947 = vmatpush2.msra.mxu0 0.0
    %948 = vmatprep.subr.mxu0 0.0
    %949 = vmatpush2.msra.mxu0 0.0
    %950 = vmatprep.subr.mxu0 0.0
    %951 = vmatpush2.msra.mxu0 0.0
    %952 = vmatprep.subr.mxu0 0.0
    %953 = vmatpush2.msra.mxu0 0.0
    %954 = vmatprep.subr.mxu0 0.0
    %955 = vmatpush2.msra.mxu0 0.0
    %956 = vmatprep.subr.mxu0 0.0
    %957 = vmatpush2.msra.mxu0 0.0
    %958 = vmatprep.subr.mxu0 0.0
    %959 = vmatpush2.msra.mxu0 0.0
    %960 = vmatprep.subr.mxu0 0.0
    %961 = vmatpush2.msra.mxu0 0.0
    %962 = vmatprep.subr.mxu0 0.0
    %963 = vmatpush2.msra.mxu0 0.0
    %964 = vmatprep.subr.mxu0 0.0
    %965 = vmatpush2.msra.mxu0 0.0
    %966 = vmatprep.subr.mxu0 0.0
    %967 = vmatpush2.msra.mxu0 0.0
    %968 = vmatprep.subr.mxu0 0.0
    %969 = vmatpush2.msra.mxu0 0.0
    %970 = vmatprep.subr.mxu0 0.0
    %971 = vmatpush2.msra.mxu0 0.0
    %972 = vmatprep.subr.mxu0 0.0
    %973 = vmatpush2.msra.mxu0 0.0
    %974 = vmatprep.subr.mxu0 0.0
    %975 = vmatpush2.msra.mxu0 0.0
    %976 = vmatprep.subr.mxu0 0.0
    %977 = vmatpush2.msra.mxu0 0.0
    %978 = vmatprep.mubr.f32.mxu0 0.0
    %979 = vmatmul.mubr.f32.gmra.mxu0 %v764
    %v980 = vpop.f32.mrf.mxu0
    %v981 = vadd.f32 0.0, %v980
    %v982 = vpop.f32.mrf.mxu0
    %983 = vdwg.mxu0
    %v988 = vcombine.low %v839, %v841
    %v989 = vcombine.low %v910, %v912
    %v992 = vadd.f32 %v769, %v988
    %v993 = vadd.f32 %v770, %v989
    %v994 = vadd.f32 %v771, %v981
    %v995 = vxor.u32 %v992, 2147483648
    %v996 = vxor.u32 %v993, 2147483648
    %v997 = vmul.f32 %v995, 1.442695
    %v998 = vpow.pop %v997
    %v999 = vmul.f32 %v996, 1.442695
    %v1000 = vpow.pop %v999
    %v1001 = vadd.f32 %v998, 1.0
    %v1002 = vadd.f32 %v1000, 1.0
    %v1003 = vrcp.pop %v1001
    %v1004 = vmul.f32 1.0, %v1003
    %v1005 = vrcp.pop %v1002
    %v1006 = vmul.f32 1.0, %v1005
    %v1007 = vtanh.pop %v994
    %v1008 = vmul.f32 %v1004, %v765
    %v1010 = vrot.slane %v1004, 4
    %v1012 = vmul.f32 %v1010, %v1007
    %v1013 = vadd.f32 %v1008, %v1012
    %v1014 = vld [vmem:[#allocation4] sm:$0xff]
    %v1016 = vsel %vm455, %v768, 0
    %v1019 = vsel %vm455, %v1014, 0
    %1021 = vmatprep.subr.mxu0 0.0
    %1022 = vmatpush1.xpose.msra.mxu0 0.0
    %1023 = vmatprep.subr.mxu0 0.0
    %1024 = vmatpush1.xpose.msra.mxu0 0.0
    %1025 = vmatprep.subr.mxu0 0.0
    %1026 = vmatpush1.xpose.msra.mxu0 0.0
    %1027 = vmatprep.subr.mxu0 0.0
    %1028 = vmatpush1.xpose.msra.mxu0 0.0
    %1029 = vmatprep.subr.mxu0 0.0
    %1030 = vmatpush1.xpose.msra.mxu0 0.0
    %1031 = vmatprep.subr.mxu0 0.0
    %1032 = vmatpush1.xpose.msra.mxu0 0.0
    %1033 = vmatprep.subr.mxu0 0.0
    %1034 = vmatpush1.xpose.msra.mxu0 0.0
    %1035 = vmatprep.subr.mxu0 0.0
    %1036 = vmatpush1.xpose.msra.mxu0 0.0
    %1037 = vmatprep.subr.mxu0 0.0
    %1038 = vmatpush1.xpose.msra.mxu0 0.0
    %1039 = vmatprep.subr.mxu0 0.0
    %1040 = vmatpush1.xpose.msra.mxu0 0.0
    %1041 = vmatprep.subr.mxu0 0.0
    %1042 = vmatpush1.xpose.msra.mxu0 0.0
    %1043 = vmatprep.subr.mxu0 0.0
    %1044 = vmatpush1.xpose.msra.mxu0 0.0
    %1045 = vmatprep.subr.mxu0 0.0
    %1046 = vmatpush1.xpose.msra.mxu0 0.0
    %1047 = vmatprep.subr.mxu0 0.0
    %1048 = vmatpush1.xpose.msra.mxu0 0.0
    %1049 = vmatprep.subr.mxu0 0.0
    %1050 = vmatpush1.xpose.msra.mxu0 0.0
    %1051 = vmatprep.subr.mxu0 0.0
    %1052 = vmatpush1.xpose.msra.mxu0 %v1019
    %1053 = vmatprep.subr.mxu0 0.0
    %1054 = vmatpush2.xpose.msra.mxu0 0.0
    %1055 = vmatprep.subr.mxu0 0.0
    %1056 = vmatpush2.xpose.msra.mxu0 0.0
    %1057 = vmatprep.subr.mxu0 0.0
    %1058 = vmatpush2.xpose.msra.mxu0 0.0
    %1059 = vmatprep.subr.mxu0 0.0
    %1060 = vmatpush2.xpose.msra.mxu0 0.0
    %1061 = vmatprep.subr.mxu0 0.0
    %1062 = vmatpush2.xpose.msra.mxu0 0.0
    %1063 = vmatprep.subr.mxu0 0.0
    %1064 = vmatpush2.xpose.msra.mxu0 0.0
    %1065 = vmatprep.subr.mxu0 0.0
    %1066 = vmatpush2.xpose.msra.mxu0 0.0
    %1067 = vmatprep.subr.mxu0 0.0
    %1068 = vmatpush2.xpose.msra.mxu0 0.0
    %1069 = vmatprep.subr.mxu0 0.0
    %1070 = vmatpush2.xpose.msra.mxu0 0.0
    %1071 = vmatprep.subr.mxu0 0.0
    %1072 = vmatpush2.xpose.msra.mxu0 0.0
    %1073 = vmatprep.subr.mxu0 0.0
    %1074 = vmatpush2.xpose.msra.mxu0 0.0
    %1075 = vmatprep.subr.mxu0 0.0
    %1076 = vmatpush2.xpose.msra.mxu0 0.0
    %1077 = vmatprep.subr.mxu0 0.0
    %1078 = vmatpush2.xpose.msra.mxu0 0.0
    %1079 = vmatprep.subr.mxu0 0.0
    %1080 = vmatpush2.xpose.msra.mxu0 0.0
    %1081 = vmatprep.subr.mxu0 0.0
    %1082 = vmatpush2.xpose.msra.mxu0 0.0
    %1083 = vmatprep.subr.mxu0 0.0
    %1084 = vmatpush2.xpose.msra.mxu0 0.0
    %1085 = vmatprep.mubr.f32.mxu0 0.0
    %1086 = vmatmul.mubr.f32.gmra.mxu0 %v1016
    %v1087 = vpop.f32.mrf.mxu0
    %v1088 = vadd.f32 0.0, %v1087
    %v1089 = vpop.f32.mrf.mxu0
    %1090 = vdwg.mxu0
    %v1091 = vld [vmem:[#allocation7] sm:$0x1]
    %v1093 = vlaneseq
    %v1094 = vshrl.u32 %v1093, 7
    %v1095 = vsub.s32 0, %v1094
    %v1096 = vrot.slane %v1091, %v1095
    %v1098 = vmul.f32 %v1088, %v1096
    %v1099 = vld [vmem:[#allocation6] sm:$0x1]
    %vm1100 = vcmp.gt.f32.partialorder %v1099, 0.5
    %v1101 = vsel %vm1100, 1, 0
    %v1102 = vlaneseq
    %v1103 = vshrl.u32 %v1102, 7
    %v1104 = vsub.s32 0, %v1103
    %v1105 = vrot.slane %v1101, %v1104
    %vm1106 = vcmp.eq.s32.totalorder %v1105, 1
    %v1107 = vsel %vm1106, %v1098, -1e+30
    %v1108 = vlaneseq
    %v1109 = vand.u32 %v1108, 127
    %vm1110 = vcmask 60416
    %v1111 = vsel %vm1110, %v1107, -inf
    %1112 = vmax.xlane.f32.xlu0 %v1111
    %v1113 = vpop.xlane.xlu0 %1112
    %vm1114 = vcmp.ge.f32.partialorder %v1107, %v1113
    %v1115 = vsel %vm1114, %v1109, 8
    %v1116 = vsel %vm1110, %v1115, 2147483647
    %v1117 = vand.u32 %v1116, 65535
    %v1118 = vshra.s32 %v1116, 16
    %v1119 = vcvt.s32.f32 %v1117
    %v1120 = vcvt.s32.f32 %v1118
    %1121 = vmin.xlane.f32.xlu0 %v1120
    %v1122 = vpop.xlane.xlu0 %1121
    %vm1123 = vcmp.eq.f32.partialorder %v1120, %v1122
    %v1124 = vsel %vm1123, %v1119, inf
    %1125 = vmin.xlane.f32.xlu0 %v1124
    %v1126 = vpop.xlane.xlu0 %1125
    %v1127 = vcvt.f32.s32 %v1126
    %v1128 = vcvt.f32.s32 %v1122
    %v1129 = vshll.u32 %v1128, 16
    %v1130 = vadd.s32 %v1129, %v1127
    %vm1131 = vcmp.eq.s32.totalorder %v1109, %v1130
    %v1132 = vsel %vm1131, 1, 0
    %v1133 = vcvt.s32.f32 %v1132
    %v1134 = vld [vmem:[#allocation5] sm:$0xff]
    %vm1135 = vcmask 64512
    %v1137 = vsel %vm1135, %v1133, 0
    %1139 = vmatprep.subr.mxu0 0.0
    %1140 = vmatpush1.msra.mxu0 0.0
    %1141 = vmatprep.subr.mxu0 0.0
    %1142 = vmatpush1.msra.mxu0 0.0
    %1143 = vmatprep.subr.mxu0 0.0
    %1144 = vmatpush1.msra.mxu0 0.0
    %1145 = vmatprep.subr.mxu0 0.0
    %1146 = vmatpush1.msra.mxu0 0.0
    %1147 = vmatprep.subr.mxu0 0.0
    %1148 = vmatpush1.msra.mxu0 0.0
    %1149 = vmatprep.subr.mxu0 0.0
    %1150 = vmatpush1.msra.mxu0 0.0
    %1151 = vmatprep.subr.mxu0 0.0
    %1152 = vmatpush1.msra.mxu0 0.0
    %1153 = vmatprep.subr.mxu0 0.0
    %1154 = vmatpush1.msra.mxu0 0.0
    %1155 = vmatprep.subr.mxu0 0.0
    %1156 = vmatpush1.msra.mxu0 0.0
    %1157 = vmatprep.subr.mxu0 0.0
    %1158 = vmatpush1.msra.mxu0 0.0
    %1159 = vmatprep.subr.mxu0 0.0
    %1160 = vmatpush1.msra.mxu0 0.0
    %1161 = vmatprep.subr.mxu0 0.0
    %1162 = vmatpush1.msra.mxu0 0.0
    %1163 = vmatprep.subr.mxu0 0.0
    %1164 = vmatpush1.msra.mxu0 0.0
    %1165 = vmatprep.subr.mxu0 0.0
    %1166 = vmatpush1.msra.mxu0 0.0
    %1167 = vmatprep.subr.mxu0 0.0
    %1168 = vmatpush1.msra.mxu0 0.0
    %1169 = vmatprep.subr.mxu0 0.0
    %1170 = vmatpush1.msra.mxu0 %v1134
    %1171 = vmatprep.subr.mxu0 0.0
    %1172 = vmatpush2.msra.mxu0 0.0
    %1173 = vmatprep.subr.mxu0 0.0
    %1174 = vmatpush2.msra.mxu0 0.0
    %1175 = vmatprep.subr.mxu0 0.0
    %1176 = vmatpush2.msra.mxu0 0.0
    %1177 = vmatprep.subr.mxu0 0.0
    %1178 = vmatpush2.msra.mxu0 0.0
    %1179 = vmatprep.subr.mxu0 0.0
    %1180 = vmatpush2.msra.mxu0 0.0
    %1181 = vmatprep.subr.mxu0 0.0
    %1182 = vmatpush2.msra.mxu0 0.0
    %1183 = vmatprep.subr.mxu0 0.0
    %1184 = vmatpush2.msra.mxu0 0.0
    %1185 = vmatprep.subr.mxu0 0.0
    %1186 = vmatpush2.msra.mxu0 0.0
    %1187 = vmatprep.subr.mxu0 0.0
    %1188 = vmatpush2.msra.mxu0 0.0
    %1189 = vmatprep.subr.mxu0 0.0
    %1190 = vmatpush2.msra.mxu0 0.0
    %1191 = vmatprep.subr.mxu0 0.0
    %1192 = vmatpush2.msra.mxu0 0.0
    %1193 = vmatprep.subr.mxu0 0.0
    %1194 = vmatpush2.msra.mxu0 0.0
    %1195 = vmatprep.subr.mxu0 0.0
    %1196 = vmatpush2.msra.mxu0 0.0
    %1197 = vmatprep.subr.mxu0 0.0
    %1198 = vmatpush2.msra.mxu0 0.0
    %1199 = vmatprep.subr.mxu0 0.0
    %1200 = vmatpush2.msra.mxu0 0.0
    %1201 = vmatprep.subr.mxu0 0.0
    %1202 = vmatpush2.msra.mxu0 0.0
    %1203 = vmatprep.mubr.f32.mxu0 0.0
    %1204 = vmatmul.mubr.f32.gmra.mxu0 %v1137
    %v1205 = vpop.f32.mrf.mxu0
    %v1206 = vadd.f32 0.0, %v1205
    %v1207 = vpop.f32.mrf.mxu0
    %1208 = vdwg.mxu0
    %p1209 = scmp.gt.s32.totalorder %s763, 0
    %p1210 = scmp.gt.s32.totalorder 0, 0
    %p1211 = por %p1209, %p1210
    %s1212 = scalar_select %p1211, 1.0, 0.0
    %v1213 = vtanh.pop %v1206
    %v1214 = vstv %s1212
    %v1215 = vmul.f32 %v1213, %v1214
    %v1217 = vrot.slane %v1006, 4
    %v1219 = vmul.f32 %v1217, %v1215
    %v1220 = vadd.f32 %v1013, %v1219
    %v1221 = vtanh.pop %v1220
    %v1222 = vmul.f32 %v1006, %v1221
    %1223 = vst [vmem:[#allocation16] sm:$0xf] %v1222
    // Predicated region
    $region252: #{dnd_lstm_sequence.1} parent=1 // pred_check
      %p1224 = pneg %p767
    $region253: #{dnd_lstm_sequence.1} parent=1 // pred_check_branch
      %1226 = sbr.rel (%p1224) target = $region255
    $region254: #{dnd_lstm_sequence.1} parent=1 // pred_region
      %p1227 = scmp.ge.s32.totalorder %s766, 8
      %s1228 = sadd.s32 %s766, 4294967288
      %s1229 = scalar_select %p1227, %s1228, %s766
      %s1230 = scalar_lea.vmem [#allocation4], %s1229
      %vm1231 = vcmask 122880
      %1232 = vst.msk [vmem:[%s1230] sm:$0x1] %vm1231, %v768
      %s1233 = scalar_lea.vmem [#allocation5], %s1229
      %1234 = vst [vmem:[%s1233] sm:$0x1] %v1220
      %s1235 = sadd.s32 %s766, 1
      %p1236 = scmp.ge.s32.totalorder %s1235, 8
      %s1237 = sadd.s32 %s766, 4294967289
      %s1238 = scalar_select %p1236, %s1237, %s1235
      %s1239 = scalar_lea.vmem [#allocation4], %s1238
      %vm1240 = vcmask 123905
      %1241 = vst.msk [vmem:[%s1239 - $0x1] sm:$0x2] %vm1240, %v768
      %s1242 = scalar_lea.vmem [#allocation5], %s1238
      %1243 = vst [vmem:[%s1242 - $0x1] sm:$0x2] %v1220
      %s1244 = sadd.s32 %s766, 2
      %p1245 = scmp.ge.s32.totalorder %s1244, 8
      %s1246 = sadd.s32 %s766, 4294967290
      %s1247 = scalar_select %p1245, %s1246, %s1244
      %s1248 = scalar_lea.vmem [#allocation4], %s1247
      %vm1249 = vcmask 124930
      %1250 = vst.msk [vmem:[%s1248 - $0x2] sm:$0x4] %vm1249, %v768
      %s1251 = scalar_lea.vmem [#allocation5], %s1247
      %1252 = vst [vmem:[%s1251 - $0x2] sm:$0x4] %v1220
      %s1253 = sadd.s32 %s766, 3
      %p1254 = scmp.ge.s32.totalorder %s1253, 8
      %s1255 = sadd.s32 %s766, 4294967291
      %s1256 = scalar_select %p1254, %s1255, %s1253
      %s1257 = scalar_lea.vmem [#allocation4], %s1256
      %vm1258 = vcmask 125955
      %1259 = vst.msk [vmem:[%s1257 - $0x3] sm:$0x8] %vm1258, %v768
      %s1260 = scalar_lea.vmem [#allocation5], %s1256
      %1261 = vst [vmem:[%s1260 - $0x3] sm:$0x8] %v1220
      %v1262 = vstv %s766
      %v1263 = vsub.s32 %v1109, %v1262
      %vm1264 = vcmp.lt.s32.totalorder %v1263, 0
      %v1265 = vadd.s32 %v1263, 8
      %v1266 = vsel %vm1264, %v1265, %v1263
      %vm1267 = vcmp.lt.s32.totalorder %v1266, 4
      %v1268 = vmul.f32 %v768, %v768
      %vm1269 = vcmask 125952
      %v1270 = vsel %vm1269, %v1268, 0.0
      %1271 = vadd.xlane.f32.xlu0 %v1270
      %v1272 = vpop.xlane.xlu0 %1271
      %v1273 = vmax.f32 %v1272, 1e-12
      %v1274 = vrsqrt.pop %v1273
      %vm1275 = vcmp.eq.s32.totalorder %v1266, 0
      %v1276 = vsel %vm1275, %v1274, 0.0
      %v1277 = vadd.f32 %v1276, 0.0
      %vm1278 = vcmp.eq.s32.totalorder %v1266, 1
      %v1279 = vsel %vm1278, %v1274, 0.0
      %v1281 = vrot.slane %v1279, 1
      %v1283 = vadd.f32 %v1277, %v1281
      %vm1284 = vcmp.eq.s32.totalorder %v1266, 2
      %v1285 = vsel %vm1284, %v1274, 0.0
      %v1287 = vrot.slane %v1285, 2
      %v1289 = vadd.f32 %v1283, %v1287
      %vm1290 = vcmp.eq.s32.totalorder %v1266, 3
      %v1291 = vsel %vm1290, %v1274, 0.0
      %v1293 = vrot.slane %v1291, 3
      %v1295 = vadd.f32 %v1289, %v1293
      %v1296 = vld [vmem:[#allocation7] sm:$0x1]
      %v1297 = vsel %vm1267, %v1295, %v1296
      %vm1298 = vcmask 57344
      %1299 = vst.msk [vmem:[#allocation7] sm:$0x1] %vm1298, %v1297
      %v1300 = vld [vmem:[#allocation6] sm:$0x1]
      %v1301 = vsel %vm1267, 1.0, %v1300
      %1302 = vst.msk [vmem:[#allocation6] sm:$0x1] %vm1298, %v1301
    $region255: #{dnd_lstm_sequence.1} parent=1 // pred_fallthru
      _
    %s1303 = sadd.s32 %s766, 4
    %p1304 = scmp.ge.s32.totalorder %s1303, 8
    %s1305 = sadd.s32 %s766, 4294967292
    %s1306 = scalar_select %p1304, %s1305, %s1303
    %s1307 = scalar_select %p767, 1, 0
    %v1308 = vstv %s1307
    %vm1309 = vcmp.eq.s32.totalorder %v1308, 1
    %v1310 = vsel %vm1309, %v1222, %v764
    %v1311 = vsel %vm1309, %v1220, %v765
    %s1312 = scalar_select %p767, %s1306, %s766
    %1313 = vst [vmem:[#allocation8] sm:$0xf] %v1310
    %1314 = vst [vmem:[#allocation9] sm:$0xf] %v1311
    %s1315 = scalar_lea.smem [#allocation11], 0
    %1316 = sst [smem:[%s1315]] %s1312
    %1317 = vst [vmem:[#allocation18] sm:$0xf] %v1311
    // Predicated region
    $region256: #{dnd_lstm_sequence.1} parent=1 // pred_check
      %p1318 = pneg %p38
    $region257: #{dnd_lstm_sequence.1} parent=1 // pred_check_branch
      %1320 = sbr.rel (%p1318) target = $region259
    $region258: #{dnd_lstm_sequence.1} parent=1 // pred_region
      %p1322 = scmp.lt.u32.totalorder 8, 8
      %p1323 = pneg %p1322
      // Predicated region
      $region260: #{dnd_lstm_sequence.1} parent=258 // pred_check
        _
      $region261: #{dnd_lstm_sequence.1} parent=258 // pred_check_branch
        %1325 = sbr.rel (%p1322) target = $region263
      $region262: #{dnd_lstm_sequence.1} parent=258 // pred_region
        %s1341 = sand.u32 8, 7
        %p1342 = scmp.eq.s32.totalorder %s1341, 0
        // Predicated region
        $region275: #{dnd_lstm_sequence.1} parent=262 // pred_check
          %p1343 = pneg %p1342
        $region276: #{dnd_lstm_sequence.1} parent=262 // pred_check_branch
          %1345 = sbr.rel (%p1343) target = $region278
        $region277: #{dnd_lstm_sequence.1} parent=262 // pred_region
          loop: start=0, step=1, limit=1
          $region279: #{dnd_lstm_sequence.1} parent=277 // loop_pre_header
            _
          $region280: #{dnd_lstm_sequence.1} parent=277 // loop_header
            %s1347 = sphi 0, %s1351
            %p1348 = scmp.ge.s32.totalorder %s1347, 1
            %s1352 = sphi [#allocation4], [#allocation4]
            %s1353 = sphi %s15, %s15
          $region281: #{dnd_lstm_sequence.1} parent=277 // loop_header_branch
            %1350 = sbr.rel (%p1348) target = $region285
          $region282: #{dnd_lstm_sequence.1} parent=277 // loop_body
            %v1354 = vld [vmem:[%s1352] sm:$0xff]
            %1355 = vst [vmem:[%s1353] sm:$0xff] %v1354
          $region283: #{dnd_lstm_sequence.1} parent=277 // loop_footer
            %s1351 = sadd.s32 1, %s1347
          $region284: #{dnd_lstm_sequence.1} parent=277 // loop_footer_branch
            %1346 = sbr.rel target = $region280
          $region285: #{dnd_lstm_sequence.1} parent=277 // loop_exit
            _
        $region278: #{dnd_lstm_sequence.1} parent=262 // pred_fallthru
          _
        %p1356 = pneg %p1342
        // Predicated region
        $region286: #{dnd_lstm_sequence.1} parent=262 // pred_check
          _
        $region287: #{dnd_lstm_sequence.1} parent=262 // pred_check_branch
          %1358 = sbr.rel (%p1342) target = $region289
        $region288: #{dnd_lstm_sequence.1} parent=262 // pred_region
          %s1359 = sand.u32 8, 7
        $region289: #{dnd_lstm_sequence.1} parent=262 // pred_fallthru
          _
      $region263: #{dnd_lstm_sequence.1} parent=258 // pred_fallthru
        _
      // Predicated region
      $region264: #{dnd_lstm_sequence.1} parent=258 // pred_check
        %p1326 = pneg %p1322
      $region265: #{dnd_lstm_sequence.1} parent=258 // pred_check_branch
        %1328 = sbr.rel (%p1326) target = $region267
      $region266: #{dnd_lstm_sequence.1} parent=258 // pred_region
        %s1329 = sshll.u32 1, 8
        %s1330 = ssub.s32 %s1329, 1
        loop: start=0, step=1, limit=1
        $region268: #{dnd_lstm_sequence.1} parent=266 // loop_pre_header
          _
        $region269: #{dnd_lstm_sequence.1} parent=266 // loop_header
          %s1332 = sphi 0, %s1336
          %p1333 = scmp.ge.s32.totalorder %s1332, 1
          %s1337 = sphi [#allocation4], [#allocation4]
          %s1338 = sphi %s15, %s15
        $region270: #{dnd_lstm_sequence.1} parent=266 // loop_header_branch
          %1335 = sbr.rel (%p1333) target = $region274
        $region271: #{dnd_lstm_sequence.1} parent=266 // loop_body
          %v1339 = vld [vmem:[%s1337] sm:%s1330]
          %1340 = vst [vmem:[%s1338] sm:%s1330] %v1339
        $region272: #{dnd_lstm_sequence.1} parent=266 // loop_footer
          %s1336 = sadd.s32 1, %s1332
        $region273: #{dnd_lstm_sequence.1} parent=266 // loop_footer_branch
          %1331 = sbr.rel target = $region269
        $region274: #{dnd_lstm_sequence.1} parent=266 // loop_exit
          _
      $region267: #{dnd_lstm_sequence.1} parent=258 // pred_fallthru
        _
      // Predicated region
      $region290: #{dnd_lstm_sequence.1} parent=258 // pred_check
        _
      $region291: #{dnd_lstm_sequence.1} parent=258 // pred_check_branch
        %1362 = sbr.rel (0) target = $region293
      $region292: #{dnd_lstm_sequence.1} parent=258 // pred_region
        %1363 = vsyncadd [#allocation12], 128
      $region293: #{dnd_lstm_sequence.1} parent=258 // pred_fallthru
        _
      %s1364 = scalar_lea.sflag [#allocation12], 1
      %p1366 = scmp.lt.u32.totalorder 8, 8
      %p1367 = pneg %p1366
      // Predicated region
      $region294: #{dnd_lstm_sequence.1} parent=258 // pred_check
        _
      $region295: #{dnd_lstm_sequence.1} parent=258 // pred_check_branch
        %1369 = sbr.rel (%p1366) target = $region297
      $region296: #{dnd_lstm_sequence.1} parent=258 // pred_region
        %s1385 = sand.u32 8, 7
        %p1386 = scmp.eq.s32.totalorder %s1385, 0
        // Predicated region
        $region309: #{dnd_lstm_sequence.1} parent=296 // pred_check
          %p1387 = pneg %p1386
        $region310: #{dnd_lstm_sequence.1} parent=296 // pred_check_branch
          %1389 = sbr.rel (%p1387) target = $region312
        $region311: #{dnd_lstm_sequence.1} parent=296 // pred_region
          loop: start=0, step=1, limit=1
          $region313: #{dnd_lstm_sequence.1} parent=311 // loop_pre_header
            _
          $region314: #{dnd_lstm_sequence.1} parent=311 // loop_header
            %s1391 = sphi 0, %s1395
            %p1392 = scmp.ge.s32.totalorder %s1391, 1
            %s1396 = sphi [#allocation5], [#allocation5]
            %s1397 = sphi %s16, %s16
          $region315: #{dnd_lstm_sequence.1} parent=311 // loop_header_branch
            %1394 = sbr.rel (%p1392) target = $region319
          $region316: #{dnd_lstm_sequence.1} parent=311 // loop_body
            %v1398 = vld [vmem:[%s1396] sm:$0xff]
            %1399 = vst [vmem:[%s1397] sm:$0xff] %v1398
          $region317: #{dnd_lstm_sequence.1} parent=311 // loop_footer
            %s1395 = sadd.s32 1, %s1391
          $region318: #{dnd_lstm_sequence.1} parent=311 // loop_footer_branch
            %1390 = sbr.rel target = $region314
          $region319: #{dnd_lstm_sequence.1} parent=311 // loop_exit
            _
        $region312: #{dnd_lstm_sequence.1} parent=296 // pred_fallthru
          _
        %p1400 = pneg %p1386
        // Predicated region
        $region320: #{dnd_lstm_sequence.1} parent=296 // pred_check
          _
        $region321: #{dnd_lstm_sequence.1} parent=296 // pred_check_branch
          %1402 = sbr.rel (%p1386) target = $region323
        $region322: #{dnd_lstm_sequence.1} parent=296 // pred_region
          %s1403 = sand.u32 8, 7
        $region323: #{dnd_lstm_sequence.1} parent=296 // pred_fallthru
          _
      $region297: #{dnd_lstm_sequence.1} parent=258 // pred_fallthru
        _
      // Predicated region
      $region298: #{dnd_lstm_sequence.1} parent=258 // pred_check
        %p1370 = pneg %p1366
      $region299: #{dnd_lstm_sequence.1} parent=258 // pred_check_branch
        %1372 = sbr.rel (%p1370) target = $region301
      $region300: #{dnd_lstm_sequence.1} parent=258 // pred_region
        %s1373 = sshll.u32 1, 8
        %s1374 = ssub.s32 %s1373, 1
        loop: start=0, step=1, limit=1
        $region302: #{dnd_lstm_sequence.1} parent=300 // loop_pre_header
          _
        $region303: #{dnd_lstm_sequence.1} parent=300 // loop_header
          %s1376 = sphi 0, %s1380
          %p1377 = scmp.ge.s32.totalorder %s1376, 1
          %s1381 = sphi [#allocation5], [#allocation5]
          %s1382 = sphi %s16, %s16
        $region304: #{dnd_lstm_sequence.1} parent=300 // loop_header_branch
          %1379 = sbr.rel (%p1377) target = $region308
        $region305: #{dnd_lstm_sequence.1} parent=300 // loop_body
          %v1383 = vld [vmem:[%s1381] sm:%s1374]
          %1384 = vst [vmem:[%s1382] sm:%s1374] %v1383
        $region306: #{dnd_lstm_sequence.1} parent=300 // loop_footer
          %s1380 = sadd.s32 1, %s1376
        $region307: #{dnd_lstm_sequence.1} parent=300 // loop_footer_branch
          %1375 = sbr.rel target = $region303
        $region308: #{dnd_lstm_sequence.1} parent=300 // loop_exit
          _
      $region301: #{dnd_lstm_sequence.1} parent=258 // pred_fallthru
        _
      // Predicated region
      $region324: #{dnd_lstm_sequence.1} parent=258 // pred_check
        _
      $region325: #{dnd_lstm_sequence.1} parent=258 // pred_check_branch
        %1406 = sbr.rel (0) target = $region327
      $region326: #{dnd_lstm_sequence.1} parent=258 // pred_region
        %1407 = vsyncadd %s1364, 128
      $region327: #{dnd_lstm_sequence.1} parent=258 // pred_fallthru
        _
      %s1408 = scalar_lea.sflag [#allocation12], 2
      %p1410 = scmp.lt.u32.totalorder 1, 8
      %p1411 = pneg %p1410
      // Predicated region
      $region328: #{dnd_lstm_sequence.1} parent=258 // pred_check
        _
      $region329: #{dnd_lstm_sequence.1} parent=258 // pred_check_branch
        %1413 = sbr.rel (%p1410) target = $region331
      $region330: #{dnd_lstm_sequence.1} parent=258 // pred_region
        %s1429 = sand.u32 1, 7
        %p1430 = scmp.eq.s32.totalorder %s1429, 0
        %p1431 = pneg %p1430
        // Predicated region
        $region343: #{dnd_lstm_sequence.1} parent=330 // pred_check
          _
        $region344: #{dnd_lstm_sequence.1} parent=330 // pred_check_branch
          %1433 = sbr.rel (%p1430) target = $region346
        $region345: #{dnd_lstm_sequence.1} parent=330 // pred_region
          %s1434 = sand.u32 1, 7
          %s1435 = ssub.s32 1, %s1434
          %s1436 = scalar_lea.vmem [#allocation6], %s1435
          %s1437 = ssub.s32 1, %s1434
          %s1438 = scalar_lea.vmem %s17, %s1437
          %s1439 = sshll.u32 1, %s1434
          %s1440 = ssub.s32 %s1439, 1
          loop: start=0, step=1, limit=1
          $region347: #{dnd_lstm_sequence.1} parent=345 // loop_pre_header
            _
          $region348: #{dnd_lstm_sequence.1} parent=345 // loop_header
            %s1442 = sphi 0, %s1446
            %p1443 = scmp.ge.s32.totalorder %s1442, 1
            %s1447 = sphi %s1436, %s1436
            %s1448 = sphi %s1438, %s1438
          $region349: #{dnd_lstm_sequence.1} parent=345 // loop_header_branch
            %1445 = sbr.rel (%p1443) target = $region353
          $region350: #{dnd_lstm_sequence.1} parent=345 // loop_body
            %v1449 = vld [vmem:[%s1447] sm:%s1440]
            %1450 = vst [vmem:[%s1448] sm:%s1440] %v1449
          $region351: #{dnd_lstm_sequence.1} parent=345 // loop_footer
            %s1446 = sadd.s32 1, %s1442
          $region352: #{dnd_lstm_sequence.1} parent=345 // loop_footer_branch
            %1441 = sbr.rel target = $region348
          $region353: #{dnd_lstm_sequence.1} parent=345 // loop_exit
            _
        $region346: #{dnd_lstm_sequence.1} parent=330 // pred_fallthru
          _
      $region331: #{dnd_lstm_sequence.1} parent=258 // pred_fallthru
        _
      // Predicated region
      $region332: #{dnd_lstm_sequence.1} parent=258 // pred_check
        %p1414 = pneg %p1410
      $region333: #{dnd_lstm_sequence.1} parent=258 // pred_check_branch
        %1416 = sbr.rel (%p1414) target = $region335
      $region334: #{dnd_lstm_sequence.1} parent=258 // pred_region
        %s1417 = sshll.u32 1, 1
        %s1418 = ssub.s32 %s1417, 1
        loop: start=0, step=1, limit=1
        $region336: #{dnd_lstm_sequence.1} parent=334 // loop_pre_header
          _
        $region337: #{dnd_lstm_sequence.1} parent=334 // loop_header
          %s1420 = sphi 0, %s1424
          %p1421 = scmp.ge.s32.totalorder %s1420, 1
          %s1425 = sphi [#allocation6], [#allocation6]
          %s1426 = sphi %s17, %s17
        $region338: #{dnd_lstm_sequence.1} parent=334 // loop_header_branch
          %1423 = sbr.rel (%p1421) target = $region342
        $region339: #{dnd_lstm_sequence.1} parent=334 // loop_body
          %v1427 = vld [vmem:[%s1425] sm:%s1418]
          %1428 = vst [vmem:[%s1426] sm:%s1418] %v1427
        $region340: #{dnd_lstm_sequence.1} parent=334 // loop_footer
          %s1424 = sadd.s32 1, %s1420
        $region341: #{dnd_lstm_sequence.1} parent=334 // loop_footer_branch
          %1419 = sbr.rel target = $region337
        $region342: #{dnd_lstm_sequence.1} parent=334 // loop_exit
          _
      $region335: #{dnd_lstm_sequence.1} parent=258 // pred_fallthru
        _
      // Predicated region
      $region354: #{dnd_lstm_sequence.1} parent=258 // pred_check
        _
      $region355: #{dnd_lstm_sequence.1} parent=258 // pred_check_branch
        %1453 = sbr.rel (0) target = $region357
      $region356: #{dnd_lstm_sequence.1} parent=258 // pred_region
        %1454 = vsyncadd %s1408, 16
      $region357: #{dnd_lstm_sequence.1} parent=258 // pred_fallthru
        _
      %s1455 = smul.u32 8, 1
      %s1456 = sshll.u32 %s1455, 4
      %1457 = dma.done [#allocation12], %s1456
      %s1458 = sshll.u32 %s1455, 4
      %1459 = dma.done %s1364, %s1458
      %s1460 = smul.u32 1, 1
      %s1461 = sshll.u32 %s1460, 4
      %1462 = dma.done %s1408, %s1461
    $region259: #{dnd_lstm_sequence.1} parent=1 // pred_fallthru
      _
    // Predicated region
    $region358: #{dnd_lstm_sequence.1} parent=1 // pred_check
      _
    $region359: #{dnd_lstm_sequence.1} parent=1 // pred_check_branch
      %1464 = sbr.rel (0) target = $region361
    $region360: #{dnd_lstm_sequence.1} parent=1 // pred_region
      %s1466 = ssub.s32 64, 64
      %1467 = vsyncadd [#allocation17], %s1466
      %s1469 = sshll.u32 [#allocation16], 4
      %s1470 = int_to_ptr.vmem [resolvable:$true] %s1469
      %1472 = dma.vmem_to_hbm [thread:$0]  %s1470, 64, %s13, [#allocation17]
    $region361: #{dnd_lstm_sequence.1} parent=1 // pred_fallthru
      _
    // Predicated region
    $region362: #{dnd_lstm_sequence.1} parent=1 // pred_check
      _
    $region363: #{dnd_lstm_sequence.1} parent=1 // pred_check_branch
      %1474 = sbr.rel (0) target = $region365
    $region364: #{dnd_lstm_sequence.1} parent=1 // pred_region
      %s1476 = ssub.s32 64, 64
      %1477 = vsyncadd [#allocation19], %s1476
      %s1479 = sshll.u32 [#allocation18], 4
      %s1480 = int_to_ptr.vmem [resolvable:$true] %s1479
      %1482 = dma.vmem_to_hbm [thread:$0]  %s1480, 64, %s14, [#allocation19]
    $region365: #{dnd_lstm_sequence.1} parent=1 // pred_fallthru
      _
    // Predicated region
    $region366: #{dnd_lstm_sequence.1} parent=1 // pred_check
      _
    $region367: #{dnd_lstm_sequence.1} parent=1 // pred_check_branch
      %1484 = sbr.rel (0) target = $region369
    $region368: #{dnd_lstm_sequence.1} parent=1 // pred_region
      %1485 = dma.done [#allocation17], 64
    $region369: #{dnd_lstm_sequence.1} parent=1 // pred_fallthru
      _
    // Predicated region
    $region370: #{dnd_lstm_sequence.1} parent=1 // pred_check
      _
    $region371: #{dnd_lstm_sequence.1} parent=1 // pred_check_branch
      %1487 = sbr.rel (0) target = $region373
    $region372: #{dnd_lstm_sequence.1} parent=1 // pred_region
      %1488 = dma.done [#allocation19], 64
    $region373: #{dnd_lstm_sequence.1} parent=1 // pred_fallthru
      _
    %1489 = vsyncpa [#allocation17], 1
    %1490 = vsyncpa [#allocation19], 1
  %1491 = vsyncmov [#allocation12]
  %s1492 = vpop.sfrf %1491
  %p1493 = scmp.eq.s32.totalorder %s1492, 0
  %p1494 = pneg %p1493
  %1496 = shalt.err (%p1494)
  %s1497 = scalar_lea.sflag [#allocation12], 1
  %1498 = vsyncmov %s1497
  %s1499 = vpop.sfrf %1498
  %p1500 = scmp.eq.s32.totalorder %s1499, 0
  %p1501 = pneg %p1500
  %1503 = shalt.err (%p1501)
  %s1504 = scalar_lea.sflag [#allocation12], 2
  %1505 = vsyncmov %s1504
  %s1506 = vpop.sfrf %1505
  %p1507 = scmp.eq.s32.totalorder %s1506, 0
  %p1508 = pneg %p1507
  %1510 = shalt.err (%p1508)
  %s1511 = scalar_lea.sflag [#allocation12], 3
  %1512 = vsyncmov %s1511
  %s1513 = vpop.sfrf %1512
  %p1514 = scmp.eq.s32.totalorder %s1513, 0
  %p1515 = pneg %p1514
  %1517 = shalt.err (%p1515)
  %s1518 = scalar_lea.sflag [#allocation12], 4
  %1519 = vsyncmov %s1518
  %s1520 = vpop.sfrf %1519
  %p1521 = scmp.eq.s32.totalorder %s1520, 0
  %p1522 = pneg %p1521
  %1524 = shalt.err (%p1522)
  %s1525 = scalar_lea.sflag [#allocation12], 5
  %1526 = vsyncmov %s1525
  %s1527 = vpop.sfrf %1526
  %p1528 = scmp.eq.s32.totalorder %s1527, 0
  %p1529 = pneg %p1528
  %1531 = shalt.err (%p1529)
  %s1532 = scalar_lea.sflag [#allocation12], 6
  %1533 = vsyncmov %s1532
  %s1534 = vpop.sfrf %1533
  %p1535 = scmp.eq.s32.totalorder %s1534, 0
  %p1536 = pneg %p1535
  %1538 = shalt.err (%p1536)
  %s1539 = scalar_lea.sflag [#allocation12], 7
  %1540 = vsyncmov %s1539
  %s1541 = vpop.sfrf %1540
  %p1542 = scmp.eq.s32.totalorder %s1541, 0
  %p1543 = pneg %p1542
  %1545 = shalt.err (%p1543)

</llo_original>
